<compile_context>
chip_gen: v7x
topology: tpu7x:2x2x1
jax: 0.10.0
libtpu: 0.0.40
codegen_flags: <defaults>
</compile_context>

<pallas_src>
import functools

import jax
import jax.numpy as jnp
import numpy as np
from jax.experimental import pallas as pl
from jax.experimental.pallas import tpu as pltpu

KSIZE = 7
PAD = 3


def cbam_kernel(x_ref, w1_ref, w2_ref, wavg_ref, wmax_ref, col_ref, o_ref, *,
                width, height):
    # x_ref:    (1, C, HW) VMEM     (lane axis = H*W -> dense)
    # w1_ref:   (C//2, C)  VMEM     w2_ref: (C, C//2) VMEM
    # wavg_ref: (7, 7) f32 VMEM     (spatial weights for avg map, [ki, kj])
    # wmax_ref: (7, 7) f32 VMEM     (spatial weights for max map, [ki, kj])
    # col_ref:  (1, HW) int32 VMEM  (column index of every flat position)
    # o_ref:    (1, C, HW) VMEM
    hw = width * height
    xf = x_ref[0].astype(jnp.float32)                 # (C, HW)

    # ---------------- Channel attention ----------------
    avg = jnp.mean(xf, axis=1, keepdims=True)         # (C, 1)
    mx = jnp.max(xf, axis=1, keepdims=True)           # (C, 1)
    pooled = jnp.concatenate([avg, mx], axis=1)       # (C, 2) - fused MLP in

    w1 = w1_ref[...].astype(jnp.float32)              # (C//2, C)
    w2 = w2_ref[...].astype(jnp.float32)              # (C, C//2)
    h = jnp.maximum(
        jnp.dot(w1, pooled, preferred_element_type=jnp.float32), 0.0)
    y = jnp.dot(w2, h, preferred_element_type=jnp.float32)    # (C, 2)
    ca = jax.nn.sigmoid(y[:, 0:1] + y[:, 1:2])        # (C, 1)
    x1 = xf * ca                                      # (C, HW) lane-dense VPU

    # ---------------- Spatial attention -----------------
    avg_map = jnp.mean(x1, axis=0, keepdims=True)     # (1, HW)
    max_map = jnp.max(x1, axis=0, keepdims=True)      # (1, HW)

    col = col_ref[...]                                # (1, HW) int32
    pos = jax.lax.broadcasted_iota(jnp.int32, (1, hw), 1)      # flat index

    # Phase 1: column shifts (XLU rolls + column-validity mask), accumulated
    # via broadcasted FMA into a sublane-packed (7, HW) row-conv buffer.
    row_conv = jnp.zeros((KSIZE, hw), jnp.float32)
    for b in range(KSIZE):                            # column offset kj
        d = b - PAD
        if d == 0:
            av_s, mx_s = avg_map, max_map
        else:
            sh = (-d) % hw                            # roll: out[p] = in[p+d]
            av_s = pltpu.roll(avg_map, sh, axis=1)
            mx_s = pltpu.roll(max_map, sh, axis=1)
            cvalid = ((col + d) >= 0) & ((col + d) < width)    # (1, HW)
            av_s = jnp.where(cvalid, av_s, 0.0)       # mask column wrap
            mx_s = jnp.where(cvalid, mx_s, 0.0)
        wa_col = wavg_ref[:, b:b + 1]                 # (7, 1) weights, all ki
        wm_col = wmax_ref[:, b:b + 1]                 # (7, 1)
        row_conv = row_conv + wa_col * av_s + wm_col * mx_s    # (7, HW)

    # Phase 2: whole-row flat shifts (XLU rolls + row-validity mask).
    conv = jnp.zeros((1, hw), jnp.float32)
    for a in range(KSIZE):                            # row offset ki
        e = a - PAD
        r = row_conv[a:a + 1, :]                      # (1, HW)
        if e != 0:
            r = pltpu.roll(r, (-e * width) % hw, axis=1)
            q = pos + e * width                       # source flat position
            rvalid = (q >= 0) & (q < hw)              # mask row wrap
            r = jnp.where(rvalid, r, 0.0)
        conv = conv + r

    sa = jax.nn.sigmoid(conv)                         # (1, HW)
    o_ref[0] = (x1 * sa).astype(o_ref.dtype)          # lane-dense store


@jax.jit
def cbam_block(x_nchw, w1, w2, wsp):
    """x_nchw: (B, C, H, W); w1: (C//2, C); w2: (C, C//2); wsp: (2, 7, 7)."""
    B, C, H, W = x_nchw.shape
    HW = H * W
    x_flat = x_nchw.reshape(B, C, HW)                 # free (contiguous) reshape

    w_avg = wsp[0].astype(jnp.float32)                # (7, 7), [ki, kj]
    w_max = wsp[1].astype(jnp.float32)                # (7, 7)

    # Column index of every flat position (single tiny int32 input; column
    # masks are computed in-kernel, row masks need no extra input at all).
    colidx = jnp.tile(jnp.arange(W, dtype=jnp.int32), H)[None, :]  # (1, HW)

    # Explicit VMEM budget: double-buffered in/out blocks + f32 working copies
    # + conv temporaries/masks + headroom; clamped to v7x's 64 MiB physical.
    itemsize = x_nchw.dtype.itemsize
    vmem_est = (4 * C * HW * itemsize       # 2x double-buffered (1,C,HW) blocks
                + 2 * C * HW * 4            # xf / x1 f32 working copies
                + 48 * HW * 4               # maps, row_conv, masks, iotas
                + (2 << 20))                # headroom
    vmem_limit = int(min(max(vmem_est, 16 << 20), 64 << 20))

    kernel = functools.partial(cbam_kernel, width=W, height=H)

    out_flat = pl.pallas_call(
        kernel,
        out_shape=jax.ShapeDtypeStruct((B, C, HW), x_nchw.dtype),
        grid=(B,),
        in_specs=[
            pl.BlockSpec((1, C, HW), lambda b: (b, 0, 0)),
            pl.BlockSpec((C // 2, C), lambda b: (0, 0)),
            pl.BlockSpec((C, C // 2), lambda b: (0, 0)),
            pl.BlockSpec((KSIZE, KSIZE), lambda b: (0, 0)),
            pl.BlockSpec((KSIZE, KSIZE), lambda b: (0, 0)),
            pl.BlockSpec((1, HW), lambda b: (0, 0)),
        ],
        out_specs=pl.BlockSpec((1, C, HW), lambda b: (b, 0, 0)),
        compiler_params=pltpu.CompilerParams(
            dimension_semantics=("parallel",),
            vmem_limit_bytes=vmem_limit),
    )(x_flat, w1.astype(jnp.float32), w2.astype(jnp.float32),
      w_avg, w_max, colidx)

    return out_flat.reshape(B, C, H, W)


def cbam_reference(x_nchw, w1, w2, wsp):
    """Pure-JAX reference of the PyTorch forward (NCHW)."""
    xf = x_nchw.astype(jnp.float32)
    # channel attention
    avg = jnp.mean(xf, axis=(2, 3))                               # (B, C)
    mx = jnp.max(xf, axis=(2, 3))                                 # (B, C)

    def mlp(v):
        return jnp.maximum(v @ w1.T, 0.0) @ w2.T

    ca = jax.nn.sigmoid(mlp(avg) + mlp(mx))                       # (B, C)
    x1 = xf * ca[:, :, None, None]
    # spatial attention
    avg_m = jnp.mean(x1, axis=1, keepdims=True)                   # (B,1,H,W)
    max_m = jnp.max(x1, axis=1, keepdims=True)                    # (B,1,H,W)
    inp = jnp.concatenate([avg_m, max_m], axis=1)                 # (B,2,H,W)
    conv = jax.lax.conv_general_dilated(
        inp, wsp[None], window_strides=(1, 1),
        padding=((PAD, PAD), (PAD, PAD)),
        dimension_numbers=("NCHW", "OIHW", "NCHW"))
    sa = jax.nn.sigmoid(conv)                                     # (B,1,H,W)
    return x1 * sa


if __name__ == "__main__":
    B, C, H, W = 2, 4, 16, 16
    ratio = 2

    key = jax.random.PRNGKey(0)
    kx, k1, k2, k3 = jax.random.split(key, 4)
    x = jax.random.normal(kx, (B, C, H, W), dtype=jnp.float32)
    # deterministic "weights" (shapes match nn.Conv2d(..., 1, bias=False) etc.)
    w1 = jax.random.normal(k1, (C // ratio, C), dtype=jnp.float32) * 0.5
    w2 = jax.random.normal(k2, (C, C // ratio), dtype=jnp.float32) * 0.5
    wsp = jax.random.normal(k3, (2, KSIZE, KSIZE), dtype=jnp.float32) * 0.2

    out = cbam_block(x, w1, w2, wsp)
    jax.block_until_ready(out)

    ref = cbam_reference(x, w1, w2, wsp)
    np.testing.assert_allclose(np.asarray(out), np.asarray(ref),
                               rtol=1e-4, atol=1e-4)
    print("KERNEL_OK")
</pallas_src>

<mosaic_0001>
module attributes {stable_mosaic.version = 11 : i64} {
  func.func @cbam_kernel(%arg0: i32, %arg1: memref<1x4x256xf32, #tpu.memory_space<vmem>>, %arg2: memref<2x4xf32, #tpu.memory_space<vmem>>, %arg3: memref<4x2xf32, #tpu.memory_space<vmem>>, %arg4: memref<7x7xf32, #tpu.memory_space<vmem>>, %arg5: memref<7x7xf32, #tpu.memory_space<vmem>>, %arg6: memref<1x256xi32, #tpu.memory_space<vmem>>, %arg7: memref<1x4x256xf32, #tpu.memory_space<vmem>>) attributes {dimension_semantics = [#tpu.dimension_semantics<parallel>], iteration_bounds = array<i64: 2>, scalar_prefetch = 0 : i64, scratch_operands = 0 : i64, tpu.core_type = #tpu.core_type<tc>, window_params = [{transform_indices = @transform_0, window_bounds = array<i64: 1, 4, 256>}, {pipeline_mode = #tpu.pipeline_mode<synchronous>, transform_indices = @transform_1, window_bounds = array<i64: 2, 4>}, {pipeline_mode = #tpu.pipeline_mode<synchronous>, transform_indices = @transform_2, window_bounds = array<i64: 4, 2>}, {pipeline_mode = #tpu.pipeline_mode<synchronous>, transform_indices = @transform_3, window_bounds = array<i64: 7, 7>}, {pipeline_mode = #tpu.pipeline_mode<synchronous>, transform_indices = @transform_4, window_bounds = array<i64: 7, 7>}, {pipeline_mode = #tpu.pipeline_mode<synchronous>, transform_indices = @transform_5, window_bounds = array<i64: 1, 256>}, {transform_indices = @transform_6, window_bounds = array<i64: 1, 4, 256>}]} {
    %c0 = arith.constant 0 : index
    %c0_0 = arith.constant 0 : index
    %c0_1 = arith.constant 0 : index
    %0 = vector.load %arg1[%c0, %c0_0, %c0_1] : memref<1x4x256xf32, #tpu.memory_space<vmem>>, vector<1x4x256xf32>
    %1 = vector.shape_cast %0 : vector<1x4x256xf32> to vector<4x256xf32>
    %cst = arith.constant dense<0.000000e+00> : vector<4xf32>
    %2 = vector.multi_reduction <add>, %1, %cst [1] : vector<4x256xf32> to vector<4xf32>
    %3 = vector.shape_cast %2 : vector<4xf32> to vector<4x1xf32>
    %cst_2 = arith.constant 2.560000e+02 : f32
    %4 = vector.broadcast %cst_2 : f32 to vector<4x1xf32>
    %5 = arith.divf %3, %4 : vector<4x1xf32>
    %cst_3 = arith.constant dense<0xFF800000> : vector<4xf32>
    %6 = vector.multi_reduction <maximumf>, %1, %cst_3 [1] : vector<4x256xf32> to vector<4xf32>
    %7 = vector.shape_cast %6 : vector<4xf32> to vector<4x1xf32>
    %8 = tpu.concatenate %5, %7 in 1 : vector<4x1xf32>, vector<4x1xf32> -> vector<4x2xf32>
    %c0_4 = arith.constant 0 : index
    %c0_5 = arith.constant 0 : index
    %9 = vector.load %arg2[%c0_4, %c0_5] : memref<2x4xf32, #tpu.memory_space<vmem>>, vector<2x4xf32>
    %c0_6 = arith.constant 0 : index
    %c0_7 = arith.constant 0 : index
    %10 = vector.load %arg3[%c0_6, %c0_7] : memref<4x2xf32, #tpu.memory_space<vmem>>, vector<4x2xf32>
    %cst_8 = arith.constant dense<0.000000e+00> : vector<2x2xf32>
    %11 = tpu.matmul %9, %8, %cst_8 {dimension_numbers = #tpu.dot_dimension_numbers<[1], [0], [0], [1], [0, 0, 1, 1], [], []>} : vector<2x4xf32>, vector<4x2xf32>, vector<2x2xf32> -> vector<2x2xf32>
    %cst_9 = arith.constant 0.000000e+00 : f32
    %12 = vector.broadcast %cst_9 : f32 to vector<2x2xf32>
    %13 = arith.maximumf %11, %12 : vector<2x2xf32>
    %cst_10 = arith.constant dense<0.000000e+00> : vector<4x2xf32>
    %14 = tpu.matmul %10, %13, %cst_10 {dimension_numbers = #tpu.dot_dimension_numbers<[1], [0], [0], [1], [0, 0, 1, 1], [], []>} : vector<4x2xf32>, vector<2x2xf32>, vector<4x2xf32> -> vector<4x2xf32>
    %15 = vector.extract_strided_slice %14 {offsets = [0, 0], sizes = [4, 1], strides = [1, 1]} : vector<4x2xf32> to vector<4x1xf32>
    %16 = vector.extract_strided_slice %14 {offsets = [0, 1], sizes = [4, 1], strides = [1, 1]} : vector<4x2xf32> to vector<4x1xf32>
    %17 = arith.addf %15, %16 : vector<4x1xf32>
    %18 = arith.negf %17 : vector<4x1xf32>
    %19 = math.exp %18 : vector<4x1xf32>
    %cst_11 = arith.constant 1.000000e+00 : f32
    %20 = vector.broadcast %cst_11 : f32 to vector<4x1xf32>
    %21 = arith.addf %20, %19 : vector<4x1xf32>
    %22 = arith.divf %20, %21 : vector<4x1xf32>
    %23 = vector.broadcast %22 : vector<4x1xf32> to vector<4x256xf32>
    %24 = arith.mulf %1, %23 : vector<4x256xf32>
    %cst_12 = arith.constant dense<0.000000e+00> : vector<256xf32>
    %25 = vector.multi_reduction <add>, %24, %cst_12 [0] : vector<4x256xf32> to vector<256xf32>
    %26 = vector.shape_cast %25 : vector<256xf32> to vector<1x256xf32>
    %cst_13 = arith.constant 4.000000e+00 : f32
    %27 = vector.broadcast %cst_13 : f32 to vector<1x256xf32>
    %28 = arith.divf %26, %27 : vector<1x256xf32>
    %cst_14 = arith.constant dense<0xFF800000> : vector<256xf32>
    %29 = vector.multi_reduction <maximumf>, %24, %cst_14 [0] : vector<4x256xf32> to vector<256xf32>
    %30 = vector.shape_cast %29 : vector<256xf32> to vector<1x256xf32>
    %c0_15 = arith.constant 0 : index
    %c0_16 = arith.constant 0 : index
    %31 = vector.load %arg6[%c0_15, %c0_16] : memref<1x256xi32, #tpu.memory_space<vmem>>, vector<1x256xi32>
    %32 = tpu.iota {dimensions = array<i32: 1>} : vector<1x256xi32>
    %cst_17 = arith.constant 0.000000e+00 : f32
    %33 = vector.broadcast %cst_17 : f32 to vector<7x256xf32>
    %c3_i32 = arith.constant 3 : i32
    %34 = tpu.dynamic_rotate %28 by %c3_i32 dim 1 : vector<1x256xf32>, i32 -> vector<1x256xf32>
    %c3_i32_18 = arith.constant 3 : i32
    %35 = tpu.dynamic_rotate %30 by %c3_i32_18 dim 1 : vector<1x256xf32>, i32 -> vector<1x256xf32>
    %c-3_i32 = arith.constant -3 : i32
    %36 = vector.broadcast %c-3_i32 : i32 to vector<1x256xi32>
    %37 = arith.addi %31, %36 : vector<1x256xi32>
    %c0_i32 = arith.constant 0 : i32
    %38 = vector.broadcast %c0_i32 : i32 to vector<1x256xi32>
    %39 = arith.cmpi sge, %37, %38 : vector<1x256xi32>
    %c-3_i32_19 = arith.constant -3 : i32
    %40 = vector.broadcast %c-3_i32_19 : i32 to vector<1x256xi32>
    %41 = arith.addi %31, %40 : vector<1x256xi32>
    %c16_i32 = arith.constant 16 : i32
    %42 = vector.broadcast %c16_i32 : i32 to vector<1x256xi32>
    %43 = arith.cmpi slt, %41, %42 : vector<1x256xi32>
    %44 = arith.andi %39, %43 : vector<1x256xi1>
    %cst_20 = arith.constant 0.000000e+00 : f32
    %45 = vector.broadcast %cst_20 : f32 to vector<1x256xf32>
    %46 = arith.select %44, %34, %45 : vector<1x256xi1>, vector<1x256xf32>
    %cst_21 = arith.constant 0.000000e+00 : f32
    %47 = vector.broadcast %cst_21 : f32 to vector<1x256xf32>
    %48 = arith.select %44, %35, %47 : vector<1x256xi1>, vector<1x256xf32>
    %c0_22 = arith.constant 0 : index
    %c0_23 = arith.constant 0 : index
    %49 = vector.load %arg4[%c0_22, %c0_23] : memref<7x7xf32, #tpu.memory_space<vmem>>, vector<7x1xf32>
    %c0_24 = arith.constant 0 : index
    %c0_25 = arith.constant 0 : index
    %50 = vector.load %arg5[%c0_24, %c0_25] : memref<7x7xf32, #tpu.memory_space<vmem>>, vector<7x1xf32>
    %51 = vector.broadcast %49 : vector<7x1xf32> to vector<7x256xf32>
    %52 = vector.broadcast %46 : vector<1x256xf32> to vector<7x256xf32>
    %53 = arith.mulf %51, %52 : vector<7x256xf32>
    %54 = arith.addf %33, %53 : vector<7x256xf32>
    %55 = vector.broadcast %50 : vector<7x1xf32> to vector<7x256xf32>
    %56 = vector.broadcast %48 : vector<1x256xf32> to vector<7x256xf32>
    %57 = arith.mulf %55, %56 : vector<7x256xf32>
    %58 = arith.addf %54, %57 : vector<7x256xf32>
    %c2_i32 = arith.constant 2 : i32
    %59 = tpu.dynamic_rotate %28 by %c2_i32 dim 1 : vector<1x256xf32>, i32 -> vector<1x256xf32>
    %c2_i32_26 = arith.constant 2 : i32
    %60 = tpu.dynamic_rotate %30 by %c2_i32_26 dim 1 : vector<1x256xf32>, i32 -> vector<1x256xf32>
    %c-2_i32 = arith.constant -2 : i32
    %61 = vector.broadcast %c-2_i32 : i32 to vector<1x256xi32>
    %62 = arith.addi %31, %61 : vector<1x256xi32>
    %c0_i32_27 = arith.constant 0 : i32
    %63 = vector.broadcast %c0_i32_27 : i32 to vector<1x256xi32>
    %64 = arith.cmpi sge, %62, %63 : vector<1x256xi32>
    %c-2_i32_28 = arith.constant -2 : i32
    %65 = vector.broadcast %c-2_i32_28 : i32 to vector<1x256xi32>
    %66 = arith.addi %31, %65 : vector<1x256xi32>
    %c16_i32_29 = arith.constant 16 : i32
    %67 = vector.broadcast %c16_i32_29 : i32 to vector<1x256xi32>
    %68 = arith.cmpi slt, %66, %67 : vector<1x256xi32>
    %69 = arith.andi %64, %68 : vector<1x256xi1>
    %cst_30 = arith.constant 0.000000e+00 : f32
    %70 = vector.broadcast %cst_30 : f32 to vector<1x256xf32>
    %71 = arith.select %69, %59, %70 : vector<1x256xi1>, vector<1x256xf32>
    %cst_31 = arith.constant 0.000000e+00 : f32
    %72 = vector.broadcast %cst_31 : f32 to vector<1x256xf32>
    %73 = arith.select %69, %60, %72 : vector<1x256xi1>, vector<1x256xf32>
    %c0_32 = arith.constant 0 : index
    %c1 = arith.constant 1 : index
    %74 = vector.load %arg4[%c0_32, %c1] : memref<7x7xf32, #tpu.memory_space<vmem>>, vector<7x1xf32>
    %c0_33 = arith.constant 0 : index
    %c1_34 = arith.constant 1 : index
    %75 = vector.load %arg5[%c0_33, %c1_34] : memref<7x7xf32, #tpu.memory_space<vmem>>, vector<7x1xf32>
    %76 = vector.broadcast %74 : vector<7x1xf32> to vector<7x256xf32>
    %77 = vector.broadcast %71 : vector<1x256xf32> to vector<7x256xf32>
    %78 = arith.mulf %76, %77 : vector<7x256xf32>
    %79 = arith.addf %58, %78 : vector<7x256xf32>
    %80 = vector.broadcast %75 : vector<7x1xf32> to vector<7x256xf32>
    %81 = vector.broadcast %73 : vector<1x256xf32> to vector<7x256xf32>
    %82 = arith.mulf %80, %81 : vector<7x256xf32>
    %83 = arith.addf %79, %82 : vector<7x256xf32>
    %c1_i32 = arith.constant 1 : i32
    %84 = tpu.dynamic_rotate %28 by %c1_i32 dim 1 : vector<1x256xf32>, i32 -> vector<1x256xf32>
    %c1_i32_35 = arith.constant 1 : i32
    %85 = tpu.dynamic_rotate %30 by %c1_i32_35 dim 1 : vector<1x256xf32>, i32 -> vector<1x256xf32>
    %c-1_i32 = arith.constant -1 : i32
    %86 = vector.broadcast %c-1_i32 : i32 to vector<1x256xi32>
    %87 = arith.addi %31, %86 : vector<1x256xi32>
    %c0_i32_36 = arith.constant 0 : i32
    %88 = vector.broadcast %c0_i32_36 : i32 to vector<1x256xi32>
    %89 = arith.cmpi sge, %87, %88 : vector<1x256xi32>
    %c-1_i32_37 = arith.constant -1 : i32
    %90 = vector.broadcast %c-1_i32_37 : i32 to vector<1x256xi32>
    %91 = arith.addi %31, %90 : vector<1x256xi32>
    %c16_i32_38 = arith.constant 16 : i32
    %92 = vector.broadcast %c16_i32_38 : i32 to vector<1x256xi32>
    %93 = arith.cmpi slt, %91, %92 : vector<1x256xi32>
    %94 = arith.andi %89, %93 : vector<1x256xi1>
    %cst_39 = arith.constant 0.000000e+00 : f32
    %95 = vector.broadcast %cst_39 : f32 to vector<1x256xf32>
    %96 = arith.select %94, %84, %95 : vector<1x256xi1>, vector<1x256xf32>
    %cst_40 = arith.constant 0.000000e+00 : f32
    %97 = vector.broadcast %cst_40 : f32 to vector<1x256xf32>
    %98 = arith.select %94, %85, %97 : vector<1x256xi1>, vector<1x256xf32>
    %c0_41 = arith.constant 0 : index
    %c2 = arith.constant 2 : index
    %99 = vector.load %arg4[%c0_41, %c2] : memref<7x7xf32, #tpu.memory_space<vmem>>, vector<7x1xf32>
    %c0_42 = arith.constant 0 : index
    %c2_43 = arith.constant 2 : index
    %100 = vector.load %arg5[%c0_42, %c2_43] : memref<7x7xf32, #tpu.memory_space<vmem>>, vector<7x1xf32>
    %101 = vector.broadcast %99 : vector<7x1xf32> to vector<7x256xf32>
    %102 = vector.broadcast %96 : vector<1x256xf32> to vector<7x256xf32>
    %103 = arith.mulf %101, %102 : vector<7x256xf32>
    %104 = arith.addf %83, %103 : vector<7x256xf32>
    %105 = vector.broadcast %100 : vector<7x1xf32> to vector<7x256xf32>
    %106 = vector.broadcast %98 : vector<1x256xf32> to vector<7x256xf32>
    %107 = arith.mulf %105, %106 : vector<7x256xf32>
    %108 = arith.addf %104, %107 : vector<7x256xf32>
    %c0_44 = arith.constant 0 : index
    %c3 = arith.constant 3 : index
    %109 = vector.load %arg4[%c0_44, %c3] : memref<7x7xf32, #tpu.memory_space<vmem>>, vector<7x1xf32>
    %c0_45 = arith.constant 0 : index
    %c3_46 = arith.constant 3 : index
    %110 = vector.load %arg5[%c0_45, %c3_46] : memref<7x7xf32, #tpu.memory_space<vmem>>, vector<7x1xf32>
    %111 = vector.broadcast %109 : vector<7x1xf32> to vector<7x256xf32>
    %112 = vector.broadcast %28 : vector<1x256xf32> to vector<7x256xf32>
    %113 = arith.mulf %111, %112 : vector<7x256xf32>
    %114 = arith.addf %108, %113 : vector<7x256xf32>
    %115 = vector.broadcast %110 : vector<7x1xf32> to vector<7x256xf32>
    %116 = vector.broadcast %30 : vector<1x256xf32> to vector<7x256xf32>
    %117 = arith.mulf %115, %116 : vector<7x256xf32>
    %118 = arith.addf %114, %117 : vector<7x256xf32>
    %c255_i32 = arith.constant 255 : i32
    %119 = tpu.dynamic_rotate %28 by %c255_i32 dim 1 : vector<1x256xf32>, i32 -> vector<1x256xf32>
    %c255_i32_47 = arith.constant 255 : i32
    %120 = tpu.dynamic_rotate %30 by %c255_i32_47 dim 1 : vector<1x256xf32>, i32 -> vector<1x256xf32>
    %c1_i32_48 = arith.constant 1 : i32
    %121 = vector.broadcast %c1_i32_48 : i32 to vector<1x256xi32>
    %122 = arith.addi %31, %121 : vector<1x256xi32>
    %c0_i32_49 = arith.constant 0 : i32
    %123 = vector.broadcast %c0_i32_49 : i32 to vector<1x256xi32>
    %124 = arith.cmpi sge, %122, %123 : vector<1x256xi32>
    %c1_i32_50 = arith.constant 1 : i32
    %125 = vector.broadcast %c1_i32_50 : i32 to vector<1x256xi32>
    %126 = arith.addi %31, %125 : vector<1x256xi32>
    %c16_i32_51 = arith.constant 16 : i32
    %127 = vector.broadcast %c16_i32_51 : i32 to vector<1x256xi32>
    %128 = arith.cmpi slt, %126, %127 : vector<1x256xi32>
    %129 = arith.andi %124, %128 : vector<1x256xi1>
    %cst_52 = arith.constant 0.000000e+00 : f32
    %130 = vector.broadcast %cst_52 : f32 to vector<1x256xf32>
    %131 = arith.select %129, %119, %130 : vector<1x256xi1>, vector<1x256xf32>
    %cst_53 = arith.constant 0.000000e+00 : f32
    %132 = vector.broadcast %cst_53 : f32 to vector<1x256xf32>
    %133 = arith.select %129, %120, %132 : vector<1x256xi1>, vector<1x256xf32>
    %c0_54 = arith.constant 0 : index
    %c4 = arith.constant 4 : index
    %134 = vector.load %arg4[%c0_54, %c4] : memref<7x7xf32, #tpu.memory_space<vmem>>, vector<7x1xf32>
    %c0_55 = arith.constant 0 : index
    %c4_56 = arith.constant 4 : index
    %135 = vector.load %arg5[%c0_55, %c4_56] : memref<7x7xf32, #tpu.memory_space<vmem>>, vector<7x1xf32>
    %136 = vector.broadcast %134 : vector<7x1xf32> to vector<7x256xf32>
    %137 = vector.broadcast %131 : vector<1x256xf32> to vector<7x256xf32>
    %138 = arith.mulf %136, %137 : vector<7x256xf32>
    %139 = arith.addf %118, %138 : vector<7x256xf32>
    %140 = vector.broadcast %135 : vector<7x1xf32> to vector<7x256xf32>
    %141 = vector.broadcast %133 : vector<1x256xf32> to vector<7x256xf32>
    %142 = arith.mulf %140, %141 : vector<7x256xf32>
    %143 = arith.addf %139, %142 : vector<7x256xf32>
    %c254_i32 = arith.constant 254 : i32
    %144 = tpu.dynamic_rotate %28 by %c254_i32 dim 1 : vector<1x256xf32>, i32 -> vector<1x256xf32>
    %c254_i32_57 = arith.constant 254 : i32
    %145 = tpu.dynamic_rotate %30 by %c254_i32_57 dim 1 : vector<1x256xf32>, i32 -> vector<1x256xf32>
    %c2_i32_58 = arith.constant 2 : i32
    %146 = vector.broadcast %c2_i32_58 : i32 to vector<1x256xi32>
    %147 = arith.addi %31, %146 : vector<1x256xi32>
    %c0_i32_59 = arith.constant 0 : i32
    %148 = vector.broadcast %c0_i32_59 : i32 to vector<1x256xi32>
    %149 = arith.cmpi sge, %147, %148 : vector<1x256xi32>
    %c2_i32_60 = arith.constant 2 : i32
    %150 = vector.broadcast %c2_i32_60 : i32 to vector<1x256xi32>
    %151 = arith.addi %31, %150 : vector<1x256xi32>
    %c16_i32_61 = arith.constant 16 : i32
    %152 = vector.broadcast %c16_i32_61 : i32 to vector<1x256xi32>
    %153 = arith.cmpi slt, %151, %152 : vector<1x256xi32>
    %154 = arith.andi %149, %153 : vector<1x256xi1>
    %cst_62 = arith.constant 0.000000e+00 : f32
    %155 = vector.broadcast %cst_62 : f32 to vector<1x256xf32>
    %156 = arith.select %154, %144, %155 : vector<1x256xi1>, vector<1x256xf32>
    %cst_63 = arith.constant 0.000000e+00 : f32
    %157 = vector.broadcast %cst_63 : f32 to vector<1x256xf32>
    %158 = arith.select %154, %145, %157 : vector<1x256xi1>, vector<1x256xf32>
    %c0_64 = arith.constant 0 : index
    %c5 = arith.constant 5 : index
    %159 = vector.load %arg4[%c0_64, %c5] : memref<7x7xf32, #tpu.memory_space<vmem>>, vector<7x1xf32>
    %c0_65 = arith.constant 0 : index
    %c5_66 = arith.constant 5 : index
    %160 = vector.load %arg5[%c0_65, %c5_66] : memref<7x7xf32, #tpu.memory_space<vmem>>, vector<7x1xf32>
    %161 = vector.broadcast %159 : vector<7x1xf32> to vector<7x256xf32>
    %162 = vector.broadcast %156 : vector<1x256xf32> to vector<7x256xf32>
    %163 = arith.mulf %161, %162 : vector<7x256xf32>
    %164 = arith.addf %143, %163 : vector<7x256xf32>
    %165 = vector.broadcast %160 : vector<7x1xf32> to vector<7x256xf32>
    %166 = vector.broadcast %158 : vector<1x256xf32> to vector<7x256xf32>
    %167 = arith.mulf %165, %166 : vector<7x256xf32>
    %168 = arith.addf %164, %167 : vector<7x256xf32>
    %c253_i32 = arith.constant 253 : i32
    %169 = tpu.dynamic_rotate %28 by %c253_i32 dim 1 : vector<1x256xf32>, i32 -> vector<1x256xf32>
    %c253_i32_67 = arith.constant 253 : i32
    %170 = tpu.dynamic_rotate %30 by %c253_i32_67 dim 1 : vector<1x256xf32>, i32 -> vector<1x256xf32>
    %c3_i32_68 = arith.constant 3 : i32
    %171 = vector.broadcast %c3_i32_68 : i32 to vector<1x256xi32>
    %172 = arith.addi %31, %171 : vector<1x256xi32>
    %c0_i32_69 = arith.constant 0 : i32
    %173 = vector.broadcast %c0_i32_69 : i32 to vector<1x256xi32>
    %174 = arith.cmpi sge, %172, %173 : vector<1x256xi32>
    %c3_i32_70 = arith.constant 3 : i32
    %175 = vector.broadcast %c3_i32_70 : i32 to vector<1x256xi32>
    %176 = arith.addi %31, %175 : vector<1x256xi32>
    %c16_i32_71 = arith.constant 16 : i32
    %177 = vector.broadcast %c16_i32_71 : i32 to vector<1x256xi32>
    %178 = arith.cmpi slt, %176, %177 : vector<1x256xi32>
    %179 = arith.andi %174, %178 : vector<1x256xi1>
    %cst_72 = arith.constant 0.000000e+00 : f32
    %180 = vector.broadcast %cst_72 : f32 to vector<1x256xf32>
    %181 = arith.select %179, %169, %180 : vector<1x256xi1>, vector<1x256xf32>
    %cst_73 = arith.constant 0.000000e+00 : f32
    %182 = vector.broadcast %cst_73 : f32 to vector<1x256xf32>
    %183 = arith.select %179, %170, %182 : vector<1x256xi1>, vector<1x256xf32>
    %c0_74 = arith.constant 0 : index
    %c6 = arith.constant 6 : index
    %184 = vector.load %arg4[%c0_74, %c6] : memref<7x7xf32, #tpu.memory_space<vmem>>, vector<7x1xf32>
    %c0_75 = arith.constant 0 : index
    %c6_76 = arith.constant 6 : index
    %185 = vector.load %arg5[%c0_75, %c6_76] : memref<7x7xf32, #tpu.memory_space<vmem>>, vector<7x1xf32>
    %186 = vector.broadcast %184 : vector<7x1xf32> to vector<7x256xf32>
    %187 = vector.broadcast %181 : vector<1x256xf32> to vector<7x256xf32>
    %188 = arith.mulf %186, %187 : vector<7x256xf32>
    %189 = arith.addf %168, %188 : vector<7x256xf32>
    %190 = vector.broadcast %185 : vector<7x1xf32> to vector<7x256xf32>
    %191 = vector.broadcast %183 : vector<1x256xf32> to vector<7x256xf32>
    %192 = arith.mulf %190, %191 : vector<7x256xf32>
    %193 = arith.addf %189, %192 : vector<7x256xf32>
    %cst_77 = arith.constant 0.000000e+00 : f32
    %194 = vector.broadcast %cst_77 : f32 to vector<1x256xf32>
    %195 = vector.extract_strided_slice %193 {offsets = [0, 0], sizes = [1, 256], strides = [1, 1]} : vector<7x256xf32> to vector<1x256xf32>
    %c48_i32 = arith.constant 48 : i32
    %196 = tpu.dynamic_rotate %195 by %c48_i32 dim 1 : vector<1x256xf32>, i32 -> vector<1x256xf32>
    %c-48_i32 = arith.constant -48 : i32
    %197 = vector.broadcast %c-48_i32 : i32 to vector<1x256xi32>
    %198 = arith.addi %32, %197 : vector<1x256xi32>
    %c0_i32_78 = arith.constant 0 : i32
    %199 = vector.broadcast %c0_i32_78 : i32 to vector<1x256xi32>
    %200 = arith.cmpi sge, %198, %199 : vector<1x256xi32>
    %c256_i32 = arith.constant 256 : i32
    %201 = vector.broadcast %c256_i32 : i32 to vector<1x256xi32>
    %202 = arith.cmpi slt, %198, %201 : vector<1x256xi32>
    %203 = arith.andi %200, %202 : vector<1x256xi1>
    %cst_79 = arith.constant 0.000000e+00 : f32
    %204 = vector.broadcast %cst_79 : f32 to vector<1x256xf32>
    %205 = arith.select %203, %196, %204 : vector<1x256xi1>, vector<1x256xf32>
    %206 = arith.addf %194, %205 : vector<1x256xf32>
    %207 = vector.extract_strided_slice %193 {offsets = [1, 0], sizes = [1, 256], strides = [1, 1]} : vector<7x256xf32> to vector<1x256xf32>
    %c32_i32 = arith.constant 32 : i32
    %208 = tpu.dynamic_rotate %207 by %c32_i32 dim 1 : vector<1x256xf32>, i32 -> vector<1x256xf32>
    %c-32_i32 = arith.constant -32 : i32
    %209 = vector.broadcast %c-32_i32 : i32 to vector<1x256xi32>
    %210 = arith.addi %32, %209 : vector<1x256xi32>
    %c0_i32_80 = arith.constant 0 : i32
    %211 = vector.broadcast %c0_i32_80 : i32 to vector<1x256xi32>
    %212 = arith.cmpi sge, %210, %211 : vector<1x256xi32>
    %c256_i32_81 = arith.constant 256 : i32
    %213 = vector.broadcast %c256_i32_81 : i32 to vector<1x256xi32>
    %214 = arith.cmpi slt, %210, %213 : vector<1x256xi32>
    %215 = arith.andi %212, %214 : vector<1x256xi1>
    %cst_82 = arith.constant 0.000000e+00 : f32
    %216 = vector.broadcast %cst_82 : f32 to vector<1x256xf32>
    %217 = arith.select %215, %208, %216 : vector<1x256xi1>, vector<1x256xf32>
    %218 = arith.addf %206, %217 : vector<1x256xf32>
    %219 = vector.extract_strided_slice %193 {offsets = [2, 0], sizes = [1, 256], strides = [1, 1]} : vector<7x256xf32> to vector<1x256xf32>
    %c16_i32_83 = arith.constant 16 : i32
    %220 = tpu.dynamic_rotate %219 by %c16_i32_83 dim 1 : vector<1x256xf32>, i32 -> vector<1x256xf32>
    %c-16_i32 = arith.constant -16 : i32
    %221 = vector.broadcast %c-16_i32 : i32 to vector<1x256xi32>
    %222 = arith.addi %32, %221 : vector<1x256xi32>
    %c0_i32_84 = arith.constant 0 : i32
    %223 = vector.broadcast %c0_i32_84 : i32 to vector<1x256xi32>
    %224 = arith.cmpi sge, %222, %223 : vector<1x256xi32>
    %c256_i32_85 = arith.constant 256 : i32
    %225 = vector.broadcast %c256_i32_85 : i32 to vector<1x256xi32>
    %226 = arith.cmpi slt, %222, %225 : vector<1x256xi32>
    %227 = arith.andi %224, %226 : vector<1x256xi1>
    %cst_86 = arith.constant 0.000000e+00 : f32
    %228 = vector.broadcast %cst_86 : f32 to vector<1x256xf32>
    %229 = arith.select %227, %220, %228 : vector<1x256xi1>, vector<1x256xf32>
    %230 = arith.addf %218, %229 : vector<1x256xf32>
    %231 = vector.extract_strided_slice %193 {offsets = [3, 0], sizes = [1, 256], strides = [1, 1]} : vector<7x256xf32> to vector<1x256xf32>
    %232 = arith.addf %230, %231 : vector<1x256xf32>
    %233 = vector.extract_strided_slice %193 {offsets = [4, 0], sizes = [1, 256], strides = [1, 1]} : vector<7x256xf32> to vector<1x256xf32>
    %c240_i32 = arith.constant 240 : i32
    %234 = tpu.dynamic_rotate %233 by %c240_i32 dim 1 : vector<1x256xf32>, i32 -> vector<1x256xf32>
    %c16_i32_87 = arith.constant 16 : i32
    %235 = vector.broadcast %c16_i32_87 : i32 to vector<1x256xi32>
    %236 = arith.addi %32, %235 : vector<1x256xi32>
    %c0_i32_88 = arith.constant 0 : i32
    %237 = vector.broadcast %c0_i32_88 : i32 to vector<1x256xi32>
    %238 = arith.cmpi sge, %236, %237 : vector<1x256xi32>
    %c256_i32_89 = arith.constant 256 : i32
    %239 = vector.broadcast %c256_i32_89 : i32 to vector<1x256xi32>
    %240 = arith.cmpi slt, %236, %239 : vector<1x256xi32>
    %241 = arith.andi %238, %240 : vector<1x256xi1>
    %cst_90 = arith.constant 0.000000e+00 : f32
    %242 = vector.broadcast %cst_90 : f32 to vector<1x256xf32>
    %243 = arith.select %241, %234, %242 : vector<1x256xi1>, vector<1x256xf32>
    %244 = arith.addf %232, %243 : vector<1x256xf32>
    %245 = vector.extract_strided_slice %193 {offsets = [5, 0], sizes = [1, 256], strides = [1, 1]} : vector<7x256xf32> to vector<1x256xf32>
    %c224_i32 = arith.constant 224 : i32
    %246 = tpu.dynamic_rotate %245 by %c224_i32 dim 1 : vector<1x256xf32>, i32 -> vector<1x256xf32>
    %c32_i32_91 = arith.constant 32 : i32
    %247 = vector.broadcast %c32_i32_91 : i32 to vector<1x256xi32>
    %248 = arith.addi %32, %247 : vector<1x256xi32>
    %c0_i32_92 = arith.constant 0 : i32
    %249 = vector.broadcast %c0_i32_92 : i32 to vector<1x256xi32>
    %250 = arith.cmpi sge, %248, %249 : vector<1x256xi32>
    %c256_i32_93 = arith.constant 256 : i32
    %251 = vector.broadcast %c256_i32_93 : i32 to vector<1x256xi32>
    %252 = arith.cmpi slt, %248, %251 : vector<1x256xi32>
    %253 = arith.andi %250, %252 : vector<1x256xi1>
    %cst_94 = arith.constant 0.000000e+00 : f32
    %254 = vector.broadcast %cst_94 : f32 to vector<1x256xf32>
    %255 = arith.select %253, %246, %254 : vector<1x256xi1>, vector<1x256xf32>
    %256 = arith.addf %244, %255 : vector<1x256xf32>
    %257 = vector.extract_strided_slice %193 {offsets = [6, 0], sizes = [1, 256], strides = [1, 1]} : vector<7x256xf32> to vector<1x256xf32>
    %c208_i32 = arith.constant 208 : i32
    %258 = tpu.dynamic_rotate %257 by %c208_i32 dim 1 : vector<1x256xf32>, i32 -> vector<1x256xf32>
    %c48_i32_95 = arith.constant 48 : i32
    %259 = vector.broadcast %c48_i32_95 : i32 to vector<1x256xi32>
    %260 = arith.addi %32, %259 : vector<1x256xi32>
    %c0_i32_96 = arith.constant 0 : i32
    %261 = vector.broadcast %c0_i32_96 : i32 to vector<1x256xi32>
    %262 = arith.cmpi sge, %260, %261 : vector<1x256xi32>
    %c256_i32_97 = arith.constant 256 : i32
    %263 = vector.broadcast %c256_i32_97 : i32 to vector<1x256xi32>
    %264 = arith.cmpi slt, %260, %263 : vector<1x256xi32>
    %265 = arith.andi %262, %264 : vector<1x256xi1>
    %cst_98 = arith.constant 0.000000e+00 : f32
    %266 = vector.broadcast %cst_98 : f32 to vector<1x256xf32>
    %267 = arith.select %265, %258, %266 : vector<1x256xi1>, vector<1x256xf32>
    %268 = arith.addf %256, %267 : vector<1x256xf32>
    %269 = arith.negf %268 : vector<1x256xf32>
    %270 = math.exp %269 : vector<1x256xf32>
    %cst_99 = arith.constant 1.000000e+00 : f32
    %271 = vector.broadcast %cst_99 : f32 to vector<1x256xf32>
    %272 = arith.addf %271, %270 : vector<1x256xf32>
    %273 = arith.divf %271, %272 : vector<1x256xf32>
    %274 = vector.broadcast %273 : vector<1x256xf32> to vector<4x256xf32>
    %275 = arith.mulf %24, %274 : vector<4x256xf32>
    %c0_100 = arith.constant 0 : index
    %c0_101 = arith.constant 0 : index
    %c0_102 = arith.constant 0 : index
    %276 = vector.load %arg7[%c0_100, %c0_101, %c0_102] : memref<1x4x256xf32, #tpu.memory_space<vmem>>, vector<1x4x256xf32>
    %277 = vector.shape_cast %276 : vector<1x4x256xf32> to vector<4x256xf32>
    %278 = vector.shape_cast %275 : vector<4x256xf32> to vector<1x4x256xf32>
    tpu.vector_store %arg7[%c0_100, %c0_101, %c0_102], %278 {strides = array<i32>} : memref<1x4x256xf32, #tpu.memory_space<vmem>>, vector<1x4x256xf32>,
    return
  }
  func.func @transform_0(%arg0: i32) -> (i32, i32, i32) {
    %c0_i32 = arith.constant 0 : i32
    %c0_i32_0 = arith.constant 0 : i32
    %c0_i32_1 = arith.constant 0 : i32
    return %arg0, %c0_i32, %c0_i32_0 : i32, i32, i32
  }
  func.func @transform_1(%arg0: i32) -> (i32, i32) {
    %c0_i32 = arith.constant 0 : i32
    %c0_i32_0 = arith.constant 0 : i32
    %c0_i32_1 = arith.constant 0 : i32
    return %c0_i32, %c0_i32_0 : i32, i32
  }
  func.func @transform_2(%arg0: i32) -> (i32, i32) {
    %c0_i32 = arith.constant 0 : i32
    %c0_i32_0 = arith.constant 0 : i32
    %c0_i32_1 = arith.constant 0 : i32
    return %c0_i32, %c0_i32_0 : i32, i32
  }
  func.func @transform_3(%arg0: i32) -> (i32, i32) {
    %c0_i32 = arith.constant 0 : i32
    %c0_i32_0 = arith.constant 0 : i32
    %c0_i32_1 = arith.constant 0 : i32
    return %c0_i32, %c0_i32_0 : i32, i32
  }
  func.func @transform_4(%arg0: i32) -> (i32, i32) {
    %c0_i32 = arith.constant 0 : i32
    %c0_i32_0 = arith.constant 0 : i32
    %c0_i32_1 = arith.constant 0 : i32
    return %c0_i32, %c0_i32_0 : i32, i32
  }
  func.func @transform_5(%arg0: i32) -> (i32, i32) {
    %c0_i32 = arith.constant 0 : i32
    %c0_i32_0 = arith.constant 0 : i32
    %c0_i32_1 = arith.constant 0 : i32
    return %c0_i32, %c0_i32_0 : i32, i32
  }
  func.func @transform_6(%arg0: i32) -> (i32, i32, i32) {
    %c0_i32 = arith.constant 0 : i32
    %c0_i32_0 = arith.constant 0 : i32
    %c0_i32_1 = arith.constant 0 : i32
    return %arg0, %c0_i32, %c0_i32_0 : i32, i32, i32
  }
}

</mosaic_0001>

<llo_original>
// kernel: tile.9
$region0: #{tile.9}
  %s0 = inlined_call_operand.vmem [shape: s32[16,16], index: 0, kind: input, shape index: {}]
  %s1 = inlined_call_operand.vmem [shape: s32[1,256], index: 1, kind: output, shape index: {}]
  $region1: #{tile.9} parent=0
    #allocation0 [shape = 'u8[8192]{0}', space=vmem, size = 0x2000, scoped, tag = 'scoped mem for output reshape']
    %s2 = smov 3
    %v3 = vld [vmem:[%s0] ss:$8 sm:%s2]
    %vm4 = vcmask 130048
    %5 = vst.msk [vmem:[#allocation0] ss:$8 sm:$0x3] %vm4, %v3
    %s6 = scalar_lea.vmem %s0, 7
    %s7 = smov 3
    %v8 = vld [vmem:[%s6] ss:$8 sm:%s7]
    %9 = vrot.lane.b32.xlu0 %v8, 112
    %v10 = vpop.permute.xlu0 %9
    %vm11 = vcmask 1048448
    %12 = vst.msk [vmem:[#allocation0] ss:$8 sm:$0x3] %vm11, %v10
    %s13 = scalar_lea.vmem %s0, 6
    %s14 = smov 3
    %v15 = vld [vmem:[%s13] ss:$8 sm:%s14]
    %16 = vrot.lane.b32.xlu0 %v15, 96
    %v17 = vpop.permute.xlu0 %16
    %vm18 = vcmask 917248
    %19 = vst.msk [vmem:[#allocation0] ss:$8 sm:$0x3] %vm18, %v17
    %s20 = scalar_lea.vmem %s0, 5
    %s21 = smov 3
    %v22 = vld [vmem:[%s20] ss:$8 sm:%s21]
    %23 = vrot.lane.b32.xlu0 %v22, 80
    %v24 = vpop.permute.xlu0 %23
    %vm25 = vcmask 786048
    %26 = vst.msk [vmem:[#allocation0] ss:$8 sm:$0x3] %vm25, %v24
    %s27 = scalar_lea.vmem %s0, 4
    %s28 = smov 3
    %v29 = vld [vmem:[%s27] ss:$8 sm:%s28]
    %30 = vrot.lane.b32.xlu0 %v29, 64
    %v31 = vpop.permute.xlu0 %30
    %vm32 = vcmask 654848
    %33 = vst.msk [vmem:[#allocation0] ss:$8 sm:$0x3] %vm32, %v31
    %s34 = scalar_lea.vmem %s0, 3
    %s35 = smov 3
    %v36 = vld [vmem:[%s34] ss:$8 sm:%s35]
    %37 = vrot.lane.b32.xlu0 %v36, 48
    %v38 = vpop.permute.xlu0 %37
    %vm39 = vcmask 523648
    %40 = vst.msk [vmem:[#allocation0] ss:$8 sm:$0x3] %vm39, %v38
    %s41 = scalar_lea.vmem %s0, 2
    %s42 = smov 3
    %v43 = vld [vmem:[%s41] ss:$8 sm:%s42]
    %44 = vrot.lane.b32.xlu0 %v43, 32
    %v45 = vpop.permute.xlu0 %44
    %vm46 = vcmask 392448
    %47 = vst.msk [vmem:[#allocation0] ss:$8 sm:$0x3] %vm46, %v45
    %s48 = scalar_lea.vmem %s0, 1
    %s49 = smov 3
    %v50 = vld [vmem:[%s48] ss:$8 sm:%s49]
    %51 = vrot.lane.b32.xlu0 %v50, 16
    %v52 = vpop.permute.xlu0 %51
    %vm53 = vcmask 261248
    %54 = vst.msk [vmem:[#allocation0] ss:$8 sm:$0x3] %vm53, %v52
    %s56 = sshllo.u32 0, 1
    %v58 = vld [vmem:[#allocation0] sm:%s56]
    %s59 = sshllo.u32 0, 1
    %60 = vst [vmem:[%s1] sm:%s59] %v58
    %s61 = scalar_lea.vmem [#allocation0], 8
    %v62 = vld [vmem:[%s61] sm:%s56]
    %s63 = sshllo.u32 0, 1
    %s64 = scalar_lea.vmem %s1, 1
    %65 = vst [vmem:[%s64] sm:%s63] %v62

// kernel: cbam_block.1
$region0: #{cbam_block.1}
  #allocation0 [shape = 'u32[]', space=smem, size = 0x4, offset = 0x4, fixed_abs, tag = 'smem constant byte address 0x4 - core index']
  #allocation1 [shape = 'u32[144,128]{1,0:T(1,128)}', space=vmem, size = 0x12000, scoped, tag = 'internal scratch']
  %s0 = inlined_call_operand.vmem [shape: f32[2,4,256], index: 0, kind: input, shape index: {}]
  %s1 = inlined_call_operand.vmem [shape: f32[2,4], index: 1, kind: input, shape index: {}]
  %s2 = inlined_call_operand.vmem [shape: f32[4,2], index: 2, kind: input, shape index: {}]
  %s3 = inlined_call_operand.vmem [shape: f32[7,7], index: 3, kind: input, shape index: {}]
  %s4 = inlined_call_operand.vmem [shape: f32[7,7], index: 4, kind: input, shape index: {}]
  %s5 = inlined_call_operand.vmem [shape: s32[1,256], index: 5, kind: input, shape index: {}]
  %s6 = inlined_call_operand.vmem [shape: f32[2,4,256], index: 6, kind: output, shape index: {}]
  %s7 = sld [smem:[#allocation0]]
  $region57: #{cbam_block.1} parent=0
    _
  %s9 = ssub.s32 1, %s7
  %s10 = scalar_select 0, %s9, %s7
  loop: start=0, step=1, limit=4
  $region2: #{cbam_block.1} parent=0 // loop_pre_header
    _
  $region3: #{cbam_block.1} parent=0 // loop_header
    %s12 = sphi 0, %s16
    %p13 = scmp.ge.s32.totalorder %s12, 4
    %s22 = sphi 0, %s24
    %s25 = sphi 0, %s22
    %s26 = sphi 0, %s25
    %s42 = sphi 0, %s26
    %s46 = sphi 0, %s46
    %s48 = sphi 0, %s46
    %s49 = sphi 0, %s48
    %s63 = sphi 0, %s49
    %s67 = sphi 0, %s67
    %s69 = sphi 0, %s67
    %s70 = sphi 0, %s69
    %s84 = sphi 0, %s70
    %s88 = sphi 0, %s88
    %s90 = sphi 0, %s88
    %s91 = sphi 0, %s90
    %s105 = sphi 0, %s91
    %s109 = sphi 0, %s109
    %s111 = sphi 0, %s109
    %s112 = sphi 0, %s111
    %s126 = sphi 0, %s112
    %s130 = sphi 0, %s130
    %s132 = sphi 0, %s130
    %s133 = sphi 0, %s132
    %s147 = sphi 0, %s133
    %s153 = sphi 0, %s155
    %s156 = sphi 0, %s153
    %s157 = sphi 0, %s156
    %s173 = sphi 0, %s157
  $region4: #{cbam_block.1} parent=0 // loop_header_branch
    %15 = sbr.rel (%p13) target = $region8
  $region5: #{cbam_block.1} parent=0 // loop_body
    %s17 = ssub.s32 %s12, 1
    %s18 = ssub.s32 %s12, 2
    %s19 = sadd.s32 %s12, 1
    %s20 = ssub.s32 %s12, %s19
    %p21 = scmp.eq.s32.totalorder %s20, 0
    %s23 = sadd.s32 %s22, 1
    %s24 = scalar_select %p21, %s22, %s23
    %p27 = pneg %p21
    %p28 = scmp.eq.s32.totalorder %s12, 1
    %p29 = por %p27, %p28
    %p30 = scmp.ne.s32.totalorder %s22, %s25
    %p31 = scmp.eq.s32.totalorder %s12, 0
    %p32 = por %p30, %p31
    %p33 = scmp.ne.s32.totalorder %s22, %s25
    %p34 = scmp.eq.s32.totalorder %s17, 1
    %p35 = por %p33, %p34
    %p36 = scmp.ne.s32.totalorder %s25, %s26
    %p37 = scmp.eq.s32.totalorder %s17, 0
    %p38 = por %p36, %p37
    %p39 = scmp.ne.s32.totalorder %s25, %s26
    %p40 = scmp.eq.s32.totalorder %s18, 1
    %p41 = por %p39, %p40
    %p43 = scmp.ne.s32.totalorder %s26, %s42
    %p44 = scmp.eq.s32.totalorder %s18, 0
    %p45 = por %p43, %p44
    %s47 = sadd.s32 %s46, 1
    %p50 = scmp.eq.s32.totalorder %s12, 1
    %p51 = scmp.ne.s32.totalorder %s46, %s48
    %p52 = scmp.eq.s32.totalorder %s12, 0
    %p53 = por %p51, %p52
    %p54 = scmp.ne.s32.totalorder %s46, %s48
    %p55 = scmp.eq.s32.totalorder %s17, 1
    %p56 = por %p54, %p55
    %p57 = scmp.ne.s32.totalorder %s48, %s49
    %p58 = scmp.eq.s32.totalorder %s17, 0
    %p59 = por %p57, %p58
    %p60 = scmp.ne.s32.totalorder %s48, %s49
    %p61 = scmp.eq.s32.totalorder %s18, 1
    %p62 = por %p60, %p61
    %p64 = scmp.ne.s32.totalorder %s49, %s63
    %p65 = scmp.eq.s32.totalorder %s18, 0
    %p66 = por %p64, %p65
    %s68 = sadd.s32 %s67, 1
    %p71 = scmp.eq.s32.totalorder %s12, 1
    %p72 = scmp.ne.s32.totalorder %s67, %s69
    %p73 = scmp.eq.s32.totalorder %s12, 0
    %p74 = por %p72, %p73
    %p75 = scmp.ne.s32.totalorder %s67, %s69
    %p76 = scmp.eq.s32.totalorder %s17, 1
    %p77 = por %p75, %p76
    %p78 = scmp.ne.s32.totalorder %s69, %s70
    %p79 = scmp.eq.s32.totalorder %s17, 0
    %p80 = por %p78, %p79
    %p81 = scmp.ne.s32.totalorder %s69, %s70
    %p82 = scmp.eq.s32.totalorder %s18, 1
    %p83 = por %p81, %p82
    %p85 = scmp.ne.s32.totalorder %s70, %s84
    %p86 = scmp.eq.s32.totalorder %s18, 0
    %p87 = por %p85, %p86
    %s89 = sadd.s32 %s88, 1
    %p92 = scmp.eq.s32.totalorder %s12, 1
    %p93 = scmp.ne.s32.totalorder %s88, %s90
    %p94 = scmp.eq.s32.totalorder %s12, 0
    %p95 = por %p93, %p94
    %p96 = scmp.ne.s32.totalorder %s88, %s90
    %p97 = scmp.eq.s32.totalorder %s17, 1
    %p98 = por %p96, %p97
    %p99 = scmp.ne.s32.totalorder %s90, %s91
    %p100 = scmp.eq.s32.totalorder %s17, 0
    %p101 = por %p99, %p100
    %p102 = scmp.ne.s32.totalorder %s90, %s91
    %p103 = scmp.eq.s32.totalorder %s18, 1
    %p104 = por %p102, %p103
    %p106 = scmp.ne.s32.totalorder %s91, %s105
    %p107 = scmp.eq.s32.totalorder %s18, 0
    %p108 = por %p106, %p107
    %s110 = sadd.s32 %s109, 1
    %p113 = scmp.eq.s32.totalorder %s12, 1
    %p114 = scmp.ne.s32.totalorder %s109, %s111
    %p115 = scmp.eq.s32.totalorder %s12, 0
    %p116 = por %p114, %p115
    %p117 = scmp.ne.s32.totalorder %s109, %s111
    %p118 = scmp.eq.s32.totalorder %s17, 1
    %p119 = por %p117, %p118
    %p120 = scmp.ne.s32.totalorder %s111, %s112
    %p121 = scmp.eq.s32.totalorder %s17, 0
    %p122 = por %p120, %p121
    %p123 = scmp.ne.s32.totalorder %s111, %s112
    %p124 = scmp.eq.s32.totalorder %s18, 1
    %p125 = por %p123, %p124
    %p127 = scmp.ne.s32.totalorder %s112, %s126
    %p128 = scmp.eq.s32.totalorder %s18, 0
    %p129 = por %p127, %p128
    %s131 = sadd.s32 %s130, 1
    %p134 = scmp.eq.s32.totalorder %s12, 1
    %p135 = scmp.ne.s32.totalorder %s130, %s132
    %p136 = scmp.eq.s32.totalorder %s12, 0
    %p137 = por %p135, %p136
    %p138 = scmp.ne.s32.totalorder %s130, %s132
    %p139 = scmp.eq.s32.totalorder %s17, 1
    %p140 = por %p138, %p139
    %p141 = scmp.ne.s32.totalorder %s132, %s133
    %p142 = scmp.eq.s32.totalorder %s17, 0
    %p143 = por %p141, %p142
    %p144 = scmp.ne.s32.totalorder %s132, %s133
    %p145 = scmp.eq.s32.totalorder %s18, 1
    %p146 = por %p144, %p145
    %p148 = scmp.ne.s32.totalorder %s133, %s147
    %p149 = scmp.eq.s32.totalorder %s18, 0
    %p150 = por %p148, %p149
    %s151 = ssub.s32 %s12, %s19
    %p152 = scmp.eq.s32.totalorder %s151, 0
    %s154 = sadd.s32 %s153, 1
    %s155 = scalar_select %p152, %s153, %s154
    %p158 = pneg %p152
    %p159 = scmp.eq.s32.totalorder %s12, 1
    %p160 = por %p158, %p159
    %p161 = scmp.ne.s32.totalorder %s153, %s156
    %p162 = scmp.eq.s32.totalorder %s12, 0
    %p163 = por %p161, %p162
    %p164 = scmp.ne.s32.totalorder %s153, %s156
    %p165 = scmp.eq.s32.totalorder %s17, 1
    %p166 = por %p164, %p165
    %p167 = scmp.ne.s32.totalorder %s156, %s157
    %p168 = scmp.eq.s32.totalorder %s17, 0
    %p169 = por %p167, %p168
    %p170 = scmp.ne.s32.totalorder %s156, %s157
    %p171 = scmp.eq.s32.totalorder %s18, 1
    %p172 = por %p170, %p171
    %p174 = scmp.ne.s32.totalorder %s157, %s173
    %p175 = scmp.eq.s32.totalorder %s18, 0
    %p176 = por %p174, %p175
    %p177 = scmp.le.s32.totalorder 1, %s12
    %p178 = scmp.lt.s32.totalorder %s12, 3
    %p179 = pnand %p177, %p178
    %p180 = pneg %p179
    // Predicated region
    $region9: #{cbam_block.1} parent=5 // pred_check
      _
    $region10: #{cbam_block.1} parent=5 // pred_check_branch
      %182 = sbr.rel (%p179) target = $region12
    $region11: #{cbam_block.1} parent=5 // pred_region
      %s183 = ssub.s32 %s12, 1
      // Predicated region
      $region13: #{cbam_block.1} parent=11 // pred_check
        %p184 = pneg %p59
      $region14: #{cbam_block.1} parent=11 // pred_check_branch
        %186 = sbr.rel (%p184) target = $region16
      $region15: #{cbam_block.1} parent=11 // pred_region
        _
      $region16: #{cbam_block.1} parent=11 // pred_fallthru
        _
      // Predicated region
      $region17: #{cbam_block.1} parent=11 // pred_check
        %p187 = pneg %p80
      $region18: #{cbam_block.1} parent=11 // pred_check_branch
        %189 = sbr.rel (%p187) target = $region20
      $region19: #{cbam_block.1} parent=11 // pred_region
        _
      $region20: #{cbam_block.1} parent=11 // pred_fallthru
        _
      // Predicated region
      $region21: #{cbam_block.1} parent=11 // pred_check
        %p190 = pneg %p101
      $region22: #{cbam_block.1} parent=11 // pred_check_branch
        %192 = sbr.rel (%p190) target = $region24
      $region23: #{cbam_block.1} parent=11 // pred_region
        _
      $region24: #{cbam_block.1} parent=11 // pred_fallthru
        _
      // Predicated region
      $region25: #{cbam_block.1} parent=11 // pred_check
        %p193 = pneg %p122
      $region26: #{cbam_block.1} parent=11 // pred_check_branch
        %195 = sbr.rel (%p193) target = $region28
      $region27: #{cbam_block.1} parent=11 // pred_region
        _
      $region28: #{cbam_block.1} parent=11 // pred_fallthru
        _
      // Predicated region
      $region29: #{cbam_block.1} parent=11 // pred_check
        %p196 = pneg %p143
      $region30: #{cbam_block.1} parent=11 // pred_check_branch
        %198 = sbr.rel (%p196) target = $region32
      $region31: #{cbam_block.1} parent=11 // pred_region
        _
      $region32: #{cbam_block.1} parent=11 // pred_fallthru
        _
    $region12: #{cbam_block.1} parent=5 // pred_fallthru
      _
    %p199 = scmp.lt.s32.totalorder %s12, 2
    // Predicated region
    $region33: #{cbam_block.1} parent=5 // pred_check
      %p200 = pneg %p199
    $region34: #{cbam_block.1} parent=5 // pred_check_branch
      %202 = sbr.rel (%p200) target = $region36
    $region35: #{cbam_block.1} parent=5 // pred_region
      // Predicated region
      $region37: #{cbam_block.1} parent=35 // pred_check
        %p203 = pneg %p32
      $region38: #{cbam_block.1} parent=35 // pred_check_branch
        %205 = sbr.rel (%p203) target = $region40
      $region39: #{cbam_block.1} parent=35 // pred_region
        %p206 = scmp.lt.s32.totalorder %s12, 1
        %s207 = scalar_select %p206, %s12, 1
        %s208 = smul.addr %s207, 2
        %s209 = smul.addr %s208, 4
        %s210 = scalar_lea.vmem %s0, %s209
      $region40: #{cbam_block.1} parent=35 // pred_fallthru
        _
    $region36: #{cbam_block.1} parent=5 // pred_fallthru
      _
    %p211 = scmp.le.s32.totalorder 1, %s12
    %p212 = scmp.lt.s32.totalorder %s12, 3
    %p213 = pnand %p211, %p212
    %p214 = pneg %p213
    // Predicated region
    $region41: #{cbam_block.1} parent=5 // pred_check
      _
    $region42: #{cbam_block.1} parent=5 // pred_check_branch
      %216 = sbr.rel (%p213) target = $region44
    $region43: #{cbam_block.1} parent=5 // pred_region
      %s217 = ssub.s32 %s12, 1
      %p218 = scmp.lt.s32.totalorder %s17, 1
      %s219 = scalar_select %p218, %s17, 1
      %s220 = smul.addr %s219, 2
      %s221 = smul.addr %s220, 4
      %s222 = scalar_lea.vmem %s0, %s221
      %p223 = pneg %p38
      %p224 = pneg %p35
      %p225 = pneg %p59
      %p226 = pneg %p56
      %p227 = pneg %p80
      %p228 = pneg %p77
      %p229 = pneg %p101
      %p230 = pneg %p98
      %p231 = pneg %p122
      %p232 = pneg %p119
      %p233 = pneg %p143
      %p234 = pneg %p140
      %p235 = pneg %p169
      %p236 = pneg %p166
      %p237 = scmp.lt.s32.totalorder %s17, 1
      %s238 = scalar_select %p237, %s17, 1
      %s239 = smul.addr %s238, 2
      %s240 = smul.addr %s239, 4
      %s241 = scalar_lea.vmem %s6, %s240
      %p242 = scmp.lt.s32.totalorder %s17, 1
      %s243 = scalar_select %p242, %s17, 1
      %s244 = smul.addr %s243, 2
      %s245 = smul.addr %s244, 4
      %s246 = scalar_lea.vmem %s0, %s245
      %p247 = scmp.lt.s32.totalorder %s17, 1
      %s248 = scalar_select %p247, %s17, 1
      %s249 = smul.addr %s248, 2
      %s250 = smul.addr %s249, 4
      %s251 = scalar_lea.vmem %s6, %s250
      %v252 = vld [vmem:[%s246] sm:$0xff]
      %v254 = vcombine.high %v252, %v252
      %vm256 = vcmask 1043456
      %v257 = vsel %vm256, %v252, 0.0
      %v258 = vsel %vm256, %v254, 0.0
      %v259 = vadd.f32 %v257, %v258
      %260 = vadd.xlane.f32.xlu0 %v259
      %v261 = vpop.xlane.xlu0 %260
      %v262 = vrcp.pop 256.0
      %v263 = vmul.f32 %v261, %v262
      %v264 = vsel %vm256, %v252, -inf
      %v265 = vsel %vm256, %v254, -inf
      %v266 = vmax.f32 %v264, %v265
      %267 = vmax.xlane.f32.xlu0 %v266
      %v268 = vpop.xlane.xlu0 %267
      %vm269 = vcmask 7168
      %v270 = vsel %vm269, %v263, %v268
      %v271 = vld [vmem:[%s1] sm:$0x3]
      %v272 = vld [vmem:[%s2] sm:$0xf]
      %vm273 = vcmask 31744
      %v275 = vsel %vm273, %v271, 0
      %v278 = vsel %vm256, %v270, 0
      %280 = vmatprep.subr.mxu0 0.0
      %281 = vmatpush1.msra.mxu0 %v278
      %282 = vmatprep.subr.mxu0 0.0
      %283 = vmatpush1.msra.mxu0 0.0
      %284 = vmatprep.subr.mxu0 0.0
      %285 = vmatpush1.msra.mxu0 0.0
      %286 = vmatprep.subr.mxu0 0.0
      %287 = vmatpush1.msra.mxu0 0.0
      %288 = vmatprep.subr.mxu0 0.0
      %289 = vmatpush1.msra.mxu0 0.0
      %290 = vmatprep.subr.mxu0 0.0
      %291 = vmatpush1.msra.mxu0 0.0
      %292 = vmatprep.subr.mxu0 0.0
      %293 = vmatpush1.msra.mxu0 0.0
      %294 = vmatprep.subr.mxu0 0.0
      %295 = vmatpush1.msra.mxu0 0.0
      %296 = vmatprep.subr.mxu0 0.0
      %297 = vmatpush1.msra.mxu0 0.0
      %298 = vmatprep.subr.mxu0 0.0
      %299 = vmatpush1.msra.mxu0 0.0
      %300 = vmatprep.subr.mxu0 0.0
      %301 = vmatpush1.msra.mxu0 0.0
      %302 = vmatprep.subr.mxu0 0.0
      %303 = vmatpush1.msra.mxu0 0.0
      %304 = vmatprep.subr.mxu0 0.0
      %305 = vmatpush1.msra.mxu0 0.0
      %306 = vmatprep.subr.mxu0 0.0
      %307 = vmatpush1.msra.mxu0 0.0
      %308 = vmatprep.subr.mxu0 0.0
      %309 = vmatpush1.msra.mxu0 0.0
      %310 = vmatprep.subr.mxu0 0.0
      %311 = vmatpush1.msra.mxu0 0.0
      %312 = vmatprep.subr.mxu0 0.0
      %313 = vmatpush1.msra.mxu0 0.0
      %314 = vmatprep.subr.mxu0 0.0
      %315 = vmatpush1.msra.mxu0 0.0
      %316 = vmatprep.subr.mxu0 0.0
      %317 = vmatpush1.msra.mxu0 0.0
      %318 = vmatprep.subr.mxu0 0.0
      %319 = vmatpush1.msra.mxu0 0.0
      %320 = vmatprep.subr.mxu0 0.0
      %321 = vmatpush1.msra.mxu0 0.0
      %322 = vmatprep.subr.mxu0 0.0
      %323 = vmatpush1.msra.mxu0 0.0
      %324 = vmatprep.subr.mxu0 0.0
      %325 = vmatpush1.msra.mxu0 0.0
      %326 = vmatprep.subr.mxu0 0.0
      %327 = vmatpush1.msra.mxu0 0.0
      %328 = vmatprep.subr.mxu0 0.0
      %329 = vmatpush1.msra.mxu0 0.0
      %330 = vmatprep.subr.mxu0 0.0
      %331 = vmatpush1.msra.mxu0 0.0
      %332 = vmatprep.subr.mxu0 0.0
      %333 = vmatpush1.msra.mxu0 0.0
      %334 = vmatprep.subr.mxu0 0.0
      %335 = vmatpush1.msra.mxu0 0.0
      %336 = vmatprep.subr.mxu0 0.0
      %337 = vmatpush1.msra.mxu0 0.0
      %338 = vmatprep.subr.mxu0 0.0
      %339 = vmatpush1.msra.mxu0 0.0
      %340 = vmatprep.subr.mxu0 0.0
      %341 = vmatpush1.msra.mxu0 0.0
      %342 = vmatprep.subr.mxu0 0.0
      %343 = vmatpush1.msra.mxu0 0.0
      %344 = vmatprep.mubr.f32.mxu0 0.0
      %345 = vmatmul.mubr.f32.gmra.mrb[0].mxu0 %v275
      %v346 = vpop.f32.mrb[0].mxu0
      %v347 = vadd.f32 0.0, %v346
      %v348 = vpop.f32.mrb[0].mxu0
      %349 = vdwg.mxu0
      %v350 = vmax.f32 %v347, 0.0
      %vm351 = vcmask 15360
      %v353 = vsel %vm351, %v272, 0
      %vm355 = vcmask 1041408
      %v357 = vsel %vm355, %v350, 0
      %359 = vmatprep.subr.mxu0 0.0
      %360 = vmatpush1.msra.mxu0 %v357
      %361 = vmatprep.subr.mxu0 0.0
      %362 = vmatpush1.msra.mxu0 0.0
      %363 = vmatprep.subr.mxu0 0.0
      %364 = vmatpush1.msra.mxu0 0.0
      %365 = vmatprep.subr.mxu0 0.0
      %366 = vmatpush1.msra.mxu0 0.0
      %367 = vmatprep.subr.mxu0 0.0
      %368 = vmatpush1.msra.mxu0 0.0
      %369 = vmatprep.subr.mxu0 0.0
      %370 = vmatpush1.msra.mxu0 0.0
      %371 = vmatprep.subr.mxu0 0.0
      %372 = vmatpush1.msra.mxu0 0.0
      %373 = vmatprep.subr.mxu0 0.0
      %374 = vmatpush1.msra.mxu0 0.0
      %375 = vmatprep.subr.mxu0 0.0
      %376 = vmatpush1.msra.mxu0 0.0
      %377 = vmatprep.subr.mxu0 0.0
      %378 = vmatpush1.msra.mxu0 0.0
      %379 = vmatprep.subr.mxu0 0.0
      %380 = vmatpush1.msra.mxu0 0.0
      %381 = vmatprep.subr.mxu0 0.0
      %382 = vmatpush1.msra.mxu0 0.0
      %383 = vmatprep.subr.mxu0 0.0
      %384 = vmatpush1.msra.mxu0 0.0
      %385 = vmatprep.subr.mxu0 0.0
      %386 = vmatpush1.msra.mxu0 0.0
      %387 = vmatprep.subr.mxu0 0.0
      %388 = vmatpush1.msra.mxu0 0.0
      %389 = vmatprep.subr.mxu0 0.0
      %390 = vmatpush1.msra.mxu0 0.0
      %391 = vmatprep.subr.mxu0 0.0
      %392 = vmatpush1.msra.mxu0 0.0
      %393 = vmatprep.subr.mxu0 0.0
      %394 = vmatpush1.msra.mxu0 0.0
      %395 = vmatprep.subr.mxu0 0.0
      %396 = vmatpush1.msra.mxu0 0.0
      %397 = vmatprep.subr.mxu0 0.0
      %398 = vmatpush1.msra.mxu0 0.0
      %399 = vmatprep.subr.mxu0 0.0
      %400 = vmatpush1.msra.mxu0 0.0
      %401 = vmatprep.subr.mxu0 0.0
      %402 = vmatpush1.msra.mxu0 0.0
      %403 = vmatprep.subr.mxu0 0.0
      %404 = vmatpush1.msra.mxu0 0.0
      %405 = vmatprep.subr.mxu0 0.0
      %406 = vmatpush1.msra.mxu0 0.0
      %407 = vmatprep.subr.mxu0 0.0
      %408 = vmatpush1.msra.mxu0 0.0
      %409 = vmatprep.subr.mxu0 0.0
      %410 = vmatpush1.msra.mxu0 0.0
      %411 = vmatprep.subr.mxu0 0.0
      %412 = vmatpush1.msra.mxu0 0.0
      %413 = vmatprep.subr.mxu0 0.0
      %414 = vmatpush1.msra.mxu0 0.0
      %415 = vmatprep.subr.mxu0 0.0
      %416 = vmatpush1.msra.mxu0 0.0
      %417 = vmatprep.subr.mxu0 0.0
      %418 = vmatpush1.msra.mxu0 0.0
      %419 = vmatprep.subr.mxu0 0.0
      %420 = vmatpush1.msra.mxu0 0.0
      %421 = vmatprep.subr.mxu0 0.0
      %422 = vmatpush1.msra.mxu0 0.0
      %423 = vmatprep.mubr.f32.mxu0 0.0
      %424 = vmatmul.mubr.f32.gmra.mrb[0].mxu0 %v353
      %v425 = vpop.f32.mrb[0].mxu0
      %v426 = vadd.f32 0.0, %v425
      %v427 = vpop.f32.mrb[0].mxu0
      %428 = vdwg.mxu0
      %430 = vrot.lane.b32.xlu0 %v426, 127
      %v431 = vpop.permute.xlu0 %430
      %v433 = vadd.f32 %v426, %v431
      %v434 = vxor.u32 %v433, 2147483648
      %v435 = vmul.f32 %v434, 1.442695
      %v436 = vpow.pop %v435
      %v437 = vadd.f32 %v436, 1.0
      %v438 = vrcp.pop %v437
      %v439 = vmul.f32 1.0, %v438
      %441 = vset.pattern.permute.xlu0 0
      %442 = vperm.xlu0 %441, %v439
      %v443 = vpop.permute.xlu0 %442
      %v445 = vunpack.c.l.s4 839922192
      %v446 = vunpack.c.0.s8 %v445
      %v447 = vlaneseq
      %v448 = vshrl.u32 %v447, 7
      %v449 = vsub.s32 %v446, %v448
      %v450 = vrot.slane %v443, %v449
      %v452 = vmul.f32 %v252, %v450
      %v454 = vcombine.high %v452, %v452
      %v456 = vsel %vm256, %v452, 0.0
      %v457 = vrot.slane %v456, 4
      %v458 = vadd.f32 %v456, %v457
      %v459 = vrot.slane %v458, 2
      %v460 = vadd.f32 %v458, %v459
      %v461 = vrot.slane %v460, 1
      %v462 = vadd.f32 %v460, %v461
      %v463 = vsel %vm256, %v454, 0.0
      %v464 = vrot.slane %v463, 4
      %v465 = vadd.f32 %v463, %v464
      %v466 = vrot.slane %v465, 2
      %v467 = vadd.f32 %v465, %v466
      %v468 = vrot.slane %v467, 1
      %v469 = vadd.f32 %v467, %v468
      %v470 = vrcp.pop 4.0
      %v471 = vmul.f32 %v462, %v470
      %v472 = vmul.f32 %v469, %v470
      %v473 = vsel %vm256, %v452, -inf
      %v474 = vrot.slane %v473, 4
      %v475 = vmax.f32 %v473, %v474
      %v476 = vrot.slane %v475, 2
      %v477 = vmax.f32 %v475, %v476
      %v478 = vrot.slane %v477, 1
      %v479 = vmax.f32 %v477, %v478
      %v480 = vsel %vm256, %v454, -inf
      %v481 = vrot.slane %v480, 4
      %v482 = vmax.f32 %v480, %v481
      %v483 = vrot.slane %v482, 2
      %v484 = vmax.f32 %v482, %v483
      %v485 = vrot.slane %v484, 1
      %v486 = vmax.f32 %v484, %v485
      %v487 = vld [vmem:[%s5] sm:$0x3]
      %v488 = vlaneseq
      %v489 = vand.u32 %v488, 127
      %v490 = vadd.s32 %v489, 128
      %491 = vrot.lane.b32.xlu0 %v471, 3
      %v492 = vpop.permute.xlu0 %491
      %493 = vrot.lane.b32.xlu0 %v472, 3
      %v494 = vpop.permute.xlu0 %493
      %vm495 = vcmp.lt.s32.totalorder %v489, 3
      %v496 = vsel %vm495, %v492, %v494
      %v497 = vsel %vm495, %v494, %v492
      %498 = vrot.lane.b32.xlu0 %v479, 3
      %v499 = vpop.permute.xlu0 %498
      %500 = vrot.lane.b32.xlu0 %v486, 3
      %v501 = vpop.permute.xlu0 %500
      %v502 = vsel %vm495, %v499, %v501
      %v503 = vsel %vm495, %v501, %v499
      %v504 = vadd.s32 %v487, 4294967293
      %vm505 = vcmp.ge.s32.totalorder %v504, 0
      %vm506 = vcmp.lt.s32.totalorder %v504, 16
      %vm507 = vmand %vm505, %vm506
      %v510 = vcombine.low %v497, %v496
      %v512 = vunpack.c.l.s4 1966171168
      %v513 = vunpack.c.0.s8 %v512
      %v514 = vlaneseq
      %v515 = vshrl.u32 %v514, 7
      %v516 = vsub.s32 %v513, %v515
      %v517 = vrot.slane %v510, %v516
      %v519 = vunpack.c.l.s4 1966171168
      %v520 = vunpack.c.0.s8 %v519
      %v521 = vlaneseq
      %v522 = vshrl.u32 %v521, 7
      %v523 = vsub.s32 %v520, %v522
      %v524 = vrot.slane %v517, %v523
      %v526 = vsel %vm507, %v524, 0.0
      %v529 = vcombine.low %v503, %v502
      %v531 = vunpack.c.l.s4 1966171168
      %v532 = vunpack.c.0.s8 %v531
      %v533 = vlaneseq
      %v534 = vshrl.u32 %v533, 7
      %v535 = vsub.s32 %v532, %v534
      %v536 = vrot.slane %v529, %v535
      %v538 = vunpack.c.l.s4 1966171168
      %v539 = vunpack.c.0.s8 %v538
      %v540 = vlaneseq
      %v541 = vshrl.u32 %v540, 7
      %v542 = vsub.s32 %v539, %v541
      %v543 = vrot.slane %v536, %v542
      %v545 = vsel %vm507, %v543, 0.0
      %v546 = vld [vmem:[%s3] sm:$0x7f]
      %v547 = vld [vmem:[%s4] sm:$0x7f]
      %549 = vset.pattern.permute.xlu0 0
      %550 = vperm.xlu0 %549, %v546
      %v551 = vpop.permute.xlu0 %550
      %v554 = vlaneseq
      %v555 = vshrl.u32 %v554, 7
      %v556 = vsub.s32 0, %v555
      %v557 = vrot.slane %v526, %v556
      %v558 = vlaneseq
      %v559 = vshrl.u32 %v558, 7
      %v560 = vsub.s32 1, %v559
      %v561 = vrot.slane %v526, %v560
      %v564 = vmul.f32 %v551, %v557
      %v565 = vmul.f32 %v551, %v561
      %v566 = vadd.f32 %v564, 0.0
      %v567 = vadd.f32 %v565, 0.0
      %569 = vset.pattern.permute.xlu0 0
      %570 = vperm.xlu0 %569, %v547
      %v571 = vpop.permute.xlu0 %570
      %v574 = vlaneseq
      %v575 = vshrl.u32 %v574, 7
      %v576 = vsub.s32 0, %v575
      %v577 = vrot.slane %v545, %v576
      %v578 = vlaneseq
      %v579 = vshrl.u32 %v578, 7
      %v580 = vsub.s32 1, %v579
      %v581 = vrot.slane %v545, %v580
      %v584 = vmul.f32 %v571, %v577
      %v585 = vmul.f32 %v571, %v581
      %v586 = vadd.f32 %v566, %v584
      %v587 = vadd.f32 %v567, %v585
      %588 = vrot.lane.b32.xlu0 %v471, 2
      %v589 = vpop.permute.xlu0 %588
      %590 = vrot.lane.b32.xlu0 %v472, 2
      %v591 = vpop.permute.xlu0 %590
      %vm592 = vcmp.lt.s32.totalorder %v489, 2
      %v593 = vsel %vm592, %v589, %v591
      %v594 = vsel %vm592, %v591, %v589
      %595 = vrot.lane.b32.xlu0 %v479, 2
      %v596 = vpop.permute.xlu0 %595
      %597 = vrot.lane.b32.xlu0 %v486, 2
      %v598 = vpop.permute.xlu0 %597
      %v599 = vsel %vm592, %v596, %v598
      %v600 = vsel %vm592, %v598, %v596
      %v601 = vadd.s32 %v487, 4294967294
      %vm602 = vcmp.ge.s32.totalorder %v601, 0
      %vm603 = vcmp.lt.s32.totalorder %v601, 16
      %vm604 = vmand %vm602, %vm603
      %v607 = vcombine.low %v594, %v593
      %v609 = vunpack.c.l.s4 1966171168
      %v610 = vunpack.c.0.s8 %v609
      %v611 = vlaneseq
      %v612 = vshrl.u32 %v611, 7
      %v613 = vsub.s32 %v610, %v612
      %v614 = vrot.slane %v607, %v613
      %v616 = vunpack.c.l.s4 1966171168
      %v617 = vunpack.c.0.s8 %v616
      %v618 = vlaneseq
      %v619 = vshrl.u32 %v618, 7
      %v620 = vsub.s32 %v617, %v619
      %v621 = vrot.slane %v614, %v620
      %v623 = vsel %vm604, %v621, 0.0
      %v626 = vcombine.low %v600, %v599
      %v628 = vunpack.c.l.s4 1966171168
      %v629 = vunpack.c.0.s8 %v628
      %v630 = vlaneseq
      %v631 = vshrl.u32 %v630, 7
      %v632 = vsub.s32 %v629, %v631
      %v633 = vrot.slane %v626, %v632
      %v635 = vunpack.c.l.s4 1966171168
      %v636 = vunpack.c.0.s8 %v635
      %v637 = vlaneseq
      %v638 = vshrl.u32 %v637, 7
      %v639 = vsub.s32 %v636, %v638
      %v640 = vrot.slane %v633, %v639
      %v642 = vsel %vm604, %v640, 0.0
      %v643 = vld [vmem:[%s3] sm:$0x7f]
      %v644 = vld [vmem:[%s4] sm:$0x7f]
      %646 = vset.pattern.permute.xlu0 1
      %647 = vperm.xlu0 %646, %v643
      %v648 = vpop.permute.xlu0 %647
      %v651 = vlaneseq
      %v652 = vshrl.u32 %v651, 7
      %v653 = vsub.s32 0, %v652
      %v654 = vrot.slane %v623, %v653
      %v655 = vlaneseq
      %v656 = vshrl.u32 %v655, 7
      %v657 = vsub.s32 1, %v656
      %v658 = vrot.slane %v623, %v657
      %v661 = vmul.f32 %v648, %v654
      %v662 = vmul.f32 %v648, %v658
      %v663 = vadd.f32 %v586, %v661
      %v664 = vadd.f32 %v587, %v662
      %666 = vset.pattern.permute.xlu0 1
      %667 = vperm.xlu0 %666, %v644
      %v668 = vpop.permute.xlu0 %667
      %v671 = vlaneseq
      %v672 = vshrl.u32 %v671, 7
      %v673 = vsub.s32 0, %v672
      %v674 = vrot.slane %v642, %v673
      %v675 = vlaneseq
      %v676 = vshrl.u32 %v675, 7
      %v677 = vsub.s32 1, %v676
      %v678 = vrot.slane %v642, %v677
      %v681 = vmul.f32 %v668, %v674
      %v682 = vmul.f32 %v668, %v678
      %v683 = vadd.f32 %v663, %v681
      %v684 = vadd.f32 %v664, %v682
      %685 = vrot.lane.b32.xlu0 %v471, 1
      %v686 = vpop.permute.xlu0 %685
      %687 = vrot.lane.b32.xlu0 %v472, 1
      %v688 = vpop.permute.xlu0 %687
      %vm689 = vcmp.lt.s32.totalorder %v489, 1
      %v690 = vsel %vm689, %v686, %v688
      %v691 = vsel %vm689, %v688, %v686
      %692 = vrot.lane.b32.xlu0 %v479, 1
      %v693 = vpop.permute.xlu0 %692
      %694 = vrot.lane.b32.xlu0 %v486, 1
      %v695 = vpop.permute.xlu0 %694
      %v696 = vsel %vm689, %v693, %v695
      %v697 = vsel %vm689, %v695, %v693
      %v698 = vadd.s32 %v487, 4294967295
      %vm699 = vcmp.ge.s32.totalorder %v698, 0
      %vm700 = vcmp.lt.s32.totalorder %v698, 16
      %vm701 = vmand %vm699, %vm700
      %v704 = vcombine.low %v691, %v690
      %v706 = vunpack.c.l.s4 1966171168
      %v707 = vunpack.c.0.s8 %v706
      %v708 = vlaneseq
      %v709 = vshrl.u32 %v708, 7
      %v710 = vsub.s32 %v707, %v709
      %v711 = vrot.slane %v704, %v710
      %v713 = vunpack.c.l.s4 1966171168
      %v714 = vunpack.c.0.s8 %v713
      %v715 = vlaneseq
      %v716 = vshrl.u32 %v715, 7
      %v717 = vsub.s32 %v714, %v716
      %v718 = vrot.slane %v711, %v717
      %v720 = vsel %vm701, %v718, 0.0
      %v723 = vcombine.low %v697, %v696
      %v725 = vunpack.c.l.s4 1966171168
      %v726 = vunpack.c.0.s8 %v725
      %v727 = vlaneseq
      %v728 = vshrl.u32 %v727, 7
      %v729 = vsub.s32 %v726, %v728
      %v730 = vrot.slane %v723, %v729
      %v732 = vunpack.c.l.s4 1966171168
      %v733 = vunpack.c.0.s8 %v732
      %v734 = vlaneseq
      %v735 = vshrl.u32 %v734, 7
      %v736 = vsub.s32 %v733, %v735
      %v737 = vrot.slane %v730, %v736
      %v739 = vsel %vm701, %v737, 0.0
      %v740 = vld [vmem:[%s3] sm:$0x7f]
      %v741 = vld [vmem:[%s4] sm:$0x7f]
      %743 = vset.pattern.permute.xlu0 2
      %744 = vperm.xlu0 %743, %v740
      %v745 = vpop.permute.xlu0 %744
      %v748 = vlaneseq
      %v749 = vshrl.u32 %v748, 7
      %v750 = vsub.s32 0, %v749
      %v751 = vrot.slane %v720, %v750
      %v752 = vlaneseq
      %v753 = vshrl.u32 %v752, 7
      %v754 = vsub.s32 1, %v753
      %v755 = vrot.slane %v720, %v754
      %v758 = vmul.f32 %v745, %v751
      %v759 = vmul.f32 %v745, %v755
      %v760 = vadd.f32 %v683, %v758
      %v761 = vadd.f32 %v684, %v759
      %763 = vset.pattern.permute.xlu0 2
      %764 = vperm.xlu0 %763, %v741
      %v765 = vpop.permute.xlu0 %764
      %v768 = vlaneseq
      %v769 = vshrl.u32 %v768, 7
      %v770 = vsub.s32 0, %v769
      %v771 = vrot.slane %v739, %v770
      %v772 = vlaneseq
      %v773 = vshrl.u32 %v772, 7
      %v774 = vsub.s32 1, %v773
      %v775 = vrot.slane %v739, %v774
      %v778 = vmul.f32 %v765, %v771
      %v779 = vmul.f32 %v765, %v775
      %v780 = vadd.f32 %v760, %v778
      %v781 = vadd.f32 %v761, %v779
      %782 = vset.pattern.permute.xlu0 3
      %783 = vperm.xlu0 %782, %v740
      %v784 = vpop.permute.xlu0 %783
      %v786 = vmul.f32 %v784, %v471
      %v787 = vmul.f32 %v784, %v472
      %v788 = vadd.f32 %v780, %v786
      %v789 = vadd.f32 %v781, %v787
      %790 = vset.pattern.permute.xlu0 3
      %791 = vperm.xlu0 %790, %v741
      %v792 = vpop.permute.xlu0 %791
      %v794 = vmul.f32 %v792, %v479
      %v795 = vmul.f32 %v792, %v486
      %v796 = vadd.f32 %v788, %v794
      %v797 = vadd.f32 %v789, %v795
      %798 = vrot.lane.b32.xlu0 %v471, 127
      %v799 = vpop.permute.xlu0 %798
      %800 = vrot.lane.b32.xlu0 %v472, 127
      %v801 = vpop.permute.xlu0 %800
      %vm802 = vcmp.lt.s32.totalorder %v489, 127
      %v803 = vsel %vm802, %v799, %v801
      %v804 = vsel %vm802, %v801, %v799
      %805 = vrot.lane.b32.xlu0 %v479, 127
      %v806 = vpop.permute.xlu0 %805
      %807 = vrot.lane.b32.xlu0 %v486, 127
      %v808 = vpop.permute.xlu0 %807
      %v809 = vsel %vm802, %v806, %v808
      %v810 = vsel %vm802, %v808, %v806
      %v811 = vadd.s32 %v487, 1
      %vm812 = vcmp.ge.s32.totalorder %v811, 0
      %vm813 = vcmp.lt.s32.totalorder %v811, 16
      %vm814 = vmand %vm812, %vm813
      %v817 = vcombine.low %v803, %v804
      %v819 = vunpack.c.l.s4 1966171168
      %v820 = vunpack.c.0.s8 %v819
      %v821 = vlaneseq
      %v822 = vshrl.u32 %v821, 7
      %v823 = vsub.s32 %v820, %v822
      %v824 = vrot.slane %v817, %v823
      %v826 = vunpack.c.l.s4 1966171168
      %v827 = vunpack.c.0.s8 %v826
      %v828 = vlaneseq
      %v829 = vshrl.u32 %v828, 7
      %v830 = vsub.s32 %v827, %v829
      %v831 = vrot.slane %v824, %v830
      %v833 = vsel %vm814, %v831, 0.0
      %v836 = vcombine.low %v809, %v810
      %v838 = vunpack.c.l.s4 1966171168
      %v839 = vunpack.c.0.s8 %v838
      %v840 = vlaneseq
      %v841 = vshrl.u32 %v840, 7
      %v842 = vsub.s32 %v839, %v841
      %v843 = vrot.slane %v836, %v842
      %v845 = vunpack.c.l.s4 1966171168
      %v846 = vunpack.c.0.s8 %v845
      %v847 = vlaneseq
      %v848 = vshrl.u32 %v847, 7
      %v849 = vsub.s32 %v846, %v848
      %v850 = vrot.slane %v843, %v849
      %v852 = vsel %vm814, %v850, 0.0
      %v853 = vld [vmem:[%s3] sm:$0x7f]
      %v854 = vld [vmem:[%s4] sm:$0x7f]
      %856 = vset.pattern.permute.xlu0 4
      %857 = vperm.xlu0 %856, %v853
      %v858 = vpop.permute.xlu0 %857
      %v861 = vlaneseq
      %v862 = vshrl.u32 %v861, 7
      %v863 = vsub.s32 0, %v862
      %v864 = vrot.slane %v833, %v863
      %v865 = vlaneseq
      %v866 = vshrl.u32 %v865, 7
      %v867 = vsub.s32 1, %v866
      %v868 = vrot.slane %v833, %v867
      %v871 = vmul.f32 %v858, %v864
      %v872 = vmul.f32 %v858, %v868
      %v873 = vadd.f32 %v796, %v871
      %v874 = vadd.f32 %v797, %v872
      %876 = vset.pattern.permute.xlu0 4
      %877 = vperm.xlu0 %876, %v854
      %v878 = vpop.permute.xlu0 %877
      %v881 = vlaneseq
      %v882 = vshrl.u32 %v881, 7
      %v883 = vsub.s32 0, %v882
      %v884 = vrot.slane %v852, %v883
      %v885 = vlaneseq
      %v886 = vshrl.u32 %v885, 7
      %v887 = vsub.s32 1, %v886
      %v888 = vrot.slane %v852, %v887
      %v891 = vmul.f32 %v878, %v884
      %v892 = vmul.f32 %v878, %v888
      %v893 = vadd.f32 %v873, %v891
      %v894 = vadd.f32 %v874, %v892
      %895 = vrot.lane.b32.xlu0 %v471, 126
      %v896 = vpop.permute.xlu0 %895
      %897 = vrot.lane.b32.xlu0 %v472, 126
      %v898 = vpop.permute.xlu0 %897
      %vm899 = vcmp.lt.s32.totalorder %v489, 126
      %v900 = vsel %vm899, %v896, %v898
      %v901 = vsel %vm899, %v898, %v896
      %902 = vrot.lane.b32.xlu0 %v479, 126
      %v903 = vpop.permute.xlu0 %902
      %904 = vrot.lane.b32.xlu0 %v486, 126
      %v905 = vpop.permute.xlu0 %904
      %v906 = vsel %vm899, %v903, %v905
      %v907 = vsel %vm899, %v905, %v903
      %v908 = vadd.s32 %v487, 2
      %vm909 = vcmp.ge.s32.totalorder %v908, 0
      %vm910 = vcmp.lt.s32.totalorder %v908, 16
      %vm911 = vmand %vm909, %vm910
      %v914 = vcombine.low %v900, %v901
      %v916 = vunpack.c.l.s4 1966171168
      %v917 = vunpack.c.0.s8 %v916
      %v918 = vlaneseq
      %v919 = vshrl.u32 %v918, 7
      %v920 = vsub.s32 %v917, %v919
      %v921 = vrot.slane %v914, %v920
      %v923 = vunpack.c.l.s4 1966171168
      %v924 = vunpack.c.0.s8 %v923
      %v925 = vlaneseq
      %v926 = vshrl.u32 %v925, 7
      %v927 = vsub.s32 %v924, %v926
      %v928 = vrot.slane %v921, %v927
      %v930 = vsel %vm911, %v928, 0.0
      %v933 = vcombine.low %v906, %v907
      %v935 = vunpack.c.l.s4 1966171168
      %v936 = vunpack.c.0.s8 %v935
      %v937 = vlaneseq
      %v938 = vshrl.u32 %v937, 7
      %v939 = vsub.s32 %v936, %v938
      %v940 = vrot.slane %v933, %v939
      %v942 = vunpack.c.l.s4 1966171168
      %v943 = vunpack.c.0.s8 %v942
      %v944 = vlaneseq
      %v945 = vshrl.u32 %v944, 7
      %v946 = vsub.s32 %v943, %v945
      %v947 = vrot.slane %v940, %v946
      %v949 = vsel %vm911, %v947, 0.0
      %v950 = vld [vmem:[%s3] sm:$0x7f]
      %v951 = vld [vmem:[%s4] sm:$0x7f]
      %953 = vset.pattern.permute.xlu0 5
      %954 = vperm.xlu0 %953, %v950
      %v955 = vpop.permute.xlu0 %954
      %v958 = vlaneseq
      %v959 = vshrl.u32 %v958, 7
      %v960 = vsub.s32 0, %v959
      %v961 = vrot.slane %v930, %v960
      %v962 = vlaneseq
      %v963 = vshrl.u32 %v962, 7
      %v964 = vsub.s32 1, %v963
      %v965 = vrot.slane %v930, %v964
      %v968 = vmul.f32 %v955, %v961
      %v969 = vmul.f32 %v955, %v965
      %v970 = vadd.f32 %v893, %v968
      %v971 = vadd.f32 %v894, %v969
      %973 = vset.pattern.permute.xlu0 5
      %974 = vperm.xlu0 %973, %v951
      %v975 = vpop.permute.xlu0 %974
      %v978 = vlaneseq
      %v979 = vshrl.u32 %v978, 7
      %v980 = vsub.s32 0, %v979
      %v981 = vrot.slane %v949, %v980
      %v982 = vlaneseq
      %v983 = vshrl.u32 %v982, 7
      %v984 = vsub.s32 1, %v983
      %v985 = vrot.slane %v949, %v984
      %v988 = vmul.f32 %v975, %v981
      %v989 = vmul.f32 %v975, %v985
      %v990 = vadd.f32 %v970, %v988
      %v991 = vadd.f32 %v971, %v989
      %992 = vrot.lane.b32.xlu0 %v471, 125
      %v993 = vpop.permute.xlu0 %992
      %994 = vrot.lane.b32.xlu0 %v472, 125
      %v995 = vpop.permute.xlu0 %994
      %vm996 = vcmp.lt.s32.totalorder %v489, 125
      %v997 = vsel %vm996, %v993, %v995
      %v998 = vsel %vm996, %v995, %v993
      %999 = vrot.lane.b32.xlu0 %v479, 125
      %v1000 = vpop.permute.xlu0 %999
      %1001 = vrot.lane.b32.xlu0 %v486, 125
      %v1002 = vpop.permute.xlu0 %1001
      %v1003 = vsel %vm996, %v1000, %v1002
      %v1004 = vsel %vm996, %v1002, %v1000
      %v1005 = vadd.s32 %v487, 3
      %vm1006 = vcmp.ge.s32.totalorder %v1005, 0
      %vm1007 = vcmp.lt.s32.totalorder %v1005, 16
      %vm1008 = vmand %vm1006, %vm1007
      %v1011 = vcombine.low %v997, %v998
      %v1013 = vunpack.c.l.s4 1966171168
      %v1014 = vunpack.c.0.s8 %v1013
      %v1015 = vlaneseq
      %v1016 = vshrl.u32 %v1015, 7
      %v1017 = vsub.s32 %v1014, %v1016
      %v1018 = vrot.slane %v1011, %v1017
      %v1020 = vunpack.c.l.s4 1966171168
      %v1021 = vunpack.c.0.s8 %v1020
      %v1022 = vlaneseq
      %v1023 = vshrl.u32 %v1022, 7
      %v1024 = vsub.s32 %v1021, %v1023
      %v1025 = vrot.slane %v1018, %v1024
      %v1027 = vsel %vm1008, %v1025, 0.0
      %v1030 = vcombine.low %v1003, %v1004
      %v1032 = vunpack.c.l.s4 1966171168
      %v1033 = vunpack.c.0.s8 %v1032
      %v1034 = vlaneseq
      %v1035 = vshrl.u32 %v1034, 7
      %v1036 = vsub.s32 %v1033, %v1035
      %v1037 = vrot.slane %v1030, %v1036
      %v1039 = vunpack.c.l.s4 1966171168
      %v1040 = vunpack.c.0.s8 %v1039
      %v1041 = vlaneseq
      %v1042 = vshrl.u32 %v1041, 7
      %v1043 = vsub.s32 %v1040, %v1042
      %v1044 = vrot.slane %v1037, %v1043
      %v1046 = vsel %vm1008, %v1044, 0.0
      %v1047 = vld [vmem:[%s3] sm:$0x7f]
      %v1048 = vld [vmem:[%s4] sm:$0x7f]
      %1050 = vset.pattern.permute.xlu0 6
      %1051 = vperm.xlu0 %1050, %v1047
      %v1052 = vpop.permute.xlu0 %1051
      %v1055 = vlaneseq
      %v1056 = vshrl.u32 %v1055, 7
      %v1057 = vsub.s32 0, %v1056
      %v1058 = vrot.slane %v1027, %v1057
      %v1059 = vlaneseq
      %v1060 = vshrl.u32 %v1059, 7
      %v1061 = vsub.s32 1, %v1060
      %v1062 = vrot.slane %v1027, %v1061
      %v1065 = vmul.f32 %v1052, %v1058
      %v1066 = vmul.f32 %v1052, %v1062
      %v1067 = vadd.f32 %v990, %v1065
      %v1068 = vadd.f32 %v991, %v1066
      %1070 = vset.pattern.permute.xlu0 6
      %1071 = vperm.xlu0 %1070, %v1048
      %v1072 = vpop.permute.xlu0 %1071
      %v1075 = vlaneseq
      %v1076 = vshrl.u32 %v1075, 7
      %v1077 = vsub.s32 0, %v1076
      %v1078 = vrot.slane %v1046, %v1077
      %v1079 = vlaneseq
      %v1080 = vshrl.u32 %v1079, 7
      %v1081 = vsub.s32 1, %v1080
      %v1082 = vrot.slane %v1046, %v1081
      %v1085 = vmul.f32 %v1072, %v1078
      %v1086 = vmul.f32 %v1072, %v1082
      %v1087 = vadd.f32 %v1067, %v1085
      %v1088 = vadd.f32 %v1068, %v1086
      %1089 = vrot.lane.b32.xlu0 %v1087, 48
      %v1090 = vpop.permute.xlu0 %1089
      %1091 = vrot.lane.b32.xlu0 %v1088, 48
      %v1092 = vpop.permute.xlu0 %1091
      %vm1093 = vcmp.lt.s32.totalorder %v489, 48
      %v1094 = vsel %vm1093, %v1090, %v1092
      %v1095 = vsel %vm1093, %v1092, %v1090
      %v1096 = vadd.s32 %v489, 4294967248
      %v1097 = vadd.s32 %v490, 4294967248
      %vm1098 = vcmp.ge.s32.totalorder %v1096, 0
      %vm1099 = vcmp.ge.s32.totalorder %v1097, 0
      %vm1100 = vcmp.lt.s32.totalorder %v1096, 256
      %vm1101 = vcmp.lt.s32.totalorder %v1097, 256
      %vm1102 = vmand %vm1098, %vm1100
      %vm1103 = vmand %vm1099, %vm1101
      %v1104 = vsel %vm1102, %v1095, 0.0
      %v1105 = vsel %vm1103, %v1094, 0.0
      %v1106 = vadd.f32 %v1104, 0.0
      %v1107 = vadd.f32 %v1105, 0.0
      %v1110 = vrot.slane %v1087, 1
      %v1111 = vrot.slane %v1088, 1
      %1114 = vrot.lane.b32.xlu0 %v1110, 32
      %v1115 = vpop.permute.xlu0 %1114
      %1116 = vrot.lane.b32.xlu0 %v1111, 32
      %v1117 = vpop.permute.xlu0 %1116
      %vm1118 = vcmp.lt.s32.totalorder %v489, 32
      %v1119 = vsel %vm1118, %v1115, %v1117
      %v1120 = vsel %vm1118, %v1117, %v1115
      %v1121 = vadd.s32 %v489, 4294967264
      %v1122 = vadd.s32 %v490, 4294967264
      %vm1123 = vcmp.ge.s32.totalorder %v1121, 0
      %vm1124 = vcmp.ge.s32.totalorder %v1122, 0
      %vm1125 = vcmp.lt.s32.totalorder %v1121, 256
      %vm1126 = vcmp.lt.s32.totalorder %v1122, 256
      %vm1127 = vmand %vm1123, %vm1125
      %vm1128 = vmand %vm1124, %vm1126
      %v1129 = vsel %vm1127, %v1120, 0.0
      %v1130 = vsel %vm1128, %v1119, 0.0
      %v1131 = vadd.f32 %v1106, %v1129
      %v1132 = vadd.f32 %v1107, %v1130
      %v1133 = vrot.slane %v1087, 2
      %v1134 = vrot.slane %v1088, 2
      %1137 = vrot.lane.b32.xlu0 %v1133, 16
      %v1138 = vpop.permute.xlu0 %1137
      %1139 = vrot.lane.b32.xlu0 %v1134, 16
      %v1140 = vpop.permute.xlu0 %1139
      %vm1141 = vcmp.lt.s32.totalorder %v489, 16
      %v1142 = vsel %vm1141, %v1138, %v1140
      %v1143 = vsel %vm1141, %v1140, %v1138
      %v1144 = vadd.s32 %v489, 4294967280
      %v1145 = vadd.s32 %v490, 4294967280
      %vm1146 = vcmp.ge.s32.totalorder %v1144, 0
      %vm1147 = vcmp.ge.s32.totalorder %v1145, 0
      %vm1148 = vcmp.lt.s32.totalorder %v1144, 256
      %vm1149 = vcmp.lt.s32.totalorder %v1145, 256
      %vm1150 = vmand %vm1146, %vm1148
      %vm1151 = vmand %vm1147, %vm1149
      %v1152 = vsel %vm1150, %v1143, 0.0
      %v1153 = vsel %vm1151, %v1142, 0.0
      %v1154 = vadd.f32 %v1131, %v1152
      %v1155 = vadd.f32 %v1132, %v1153
      %v1156 = vrot.slane %v1087, 3
      %v1157 = vrot.slane %v1088, 3
      %v1160 = vadd.f32 %v1154, %v1156
      %v1161 = vadd.f32 %v1155, %v1157
      %v1162 = vrot.slane %v1087, 4
      %v1163 = vrot.slane %v1088, 4
      %1166 = vrot.lane.b32.xlu0 %v1162, 112
      %v1167 = vpop.permute.xlu0 %1166
      %1168 = vrot.lane.b32.xlu0 %v1163, 112
      %v1169 = vpop.permute.xlu0 %1168
      %vm1170 = vcmp.lt.s32.totalorder %v489, 112
      %v1171 = vsel %vm1170, %v1167, %v1169
      %v1172 = vsel %vm1170, %v1169, %v1167
      %v1173 = vadd.s32 %v489, 16
      %v1174 = vadd.s32 %v490, 16
      %vm1175 = vcmp.ge.s32.totalorder %v1173, 0
      %vm1176 = vcmp.ge.s32.totalorder %v1174, 0
      %vm1177 = vcmp.lt.s32.totalorder %v1173, 256
      %vm1178 = vcmp.lt.s32.totalorder %v1174, 256
      %vm1179 = vmand %vm1175, %vm1177
      %vm1180 = vmand %vm1176, %vm1178
      %v1181 = vsel %vm1179, %v1171, 0.0
      %v1182 = vsel %vm1180, %v1172, 0.0
      %v1183 = vadd.f32 %v1160, %v1181
      %v1184 = vadd.f32 %v1161, %v1182
      %v1185 = vrot.slane %v1087, 5
      %v1186 = vrot.slane %v1088, 5
      %1189 = vrot.lane.b32.xlu0 %v1185, 96
      %v1190 = vpop.permute.xlu0 %1189
      %1191 = vrot.lane.b32.xlu0 %v1186, 96
      %v1192 = vpop.permute.xlu0 %1191
      %vm1193 = vcmp.lt.s32.totalorder %v489, 96
      %v1194 = vsel %vm1193, %v1190, %v1192
      %v1195 = vsel %vm1193, %v1192, %v1190
      %v1196 = vadd.s32 %v489, 32
      %v1197 = vadd.s32 %v490, 32
      %vm1198 = vcmp.ge.s32.totalorder %v1196, 0
      %vm1199 = vcmp.ge.s32.totalorder %v1197, 0
      %vm1200 = vcmp.lt.s32.totalorder %v1196, 256
      %vm1201 = vcmp.lt.s32.totalorder %v1197, 256
      %vm1202 = vmand %vm1198, %vm1200
      %vm1203 = vmand %vm1199, %vm1201
      %v1204 = vsel %vm1202, %v1194, 0.0
      %v1205 = vsel %vm1203, %v1195, 0.0
      %v1206 = vadd.f32 %v1183, %v1204
      %v1207 = vadd.f32 %v1184, %v1205
      %v1208 = vrot.slane %v1087, 6
      %v1209 = vrot.slane %v1088, 6
      %1212 = vrot.lane.b32.xlu0 %v1208, 80
      %v1213 = vpop.permute.xlu0 %1212
      %1214 = vrot.lane.b32.xlu0 %v1209, 80
      %v1215 = vpop.permute.xlu0 %1214
      %vm1216 = vcmp.lt.s32.totalorder %v489, 80
      %v1217 = vsel %vm1216, %v1213, %v1215
      %v1218 = vsel %vm1216, %v1215, %v1213
      %v1219 = vadd.s32 %v489, 48
      %v1220 = vadd.s32 %v490, 48
      %vm1221 = vcmp.ge.s32.totalorder %v1219, 0
      %vm1222 = vcmp.ge.s32.totalorder %v1220, 0
      %vm1223 = vcmp.lt.s32.totalorder %v1219, 256
      %vm1224 = vcmp.lt.s32.totalorder %v1220, 256
      %vm1225 = vmand %vm1221, %vm1223
      %vm1226 = vmand %vm1222, %vm1224
      %v1227 = vsel %vm1225, %v1217, 0.0
      %v1228 = vsel %vm1226, %v1218, 0.0
      %v1229 = vadd.f32 %v1206, %v1227
      %v1230 = vadd.f32 %v1207, %v1228
      %v1231 = vxor.u32 %v1229, 2147483648
      %v1232 = vxor.u32 %v1230, 2147483648
      %v1233 = vmul.f32 %v1231, 1.442695
      %v1234 = vpow.pop %v1233
      %v1235 = vmul.f32 %v1232, 1.442695
      %v1236 = vpow.pop %v1235
      %v1237 = vadd.f32 %v1234, 1.0
      %v1238 = vadd.f32 %v1236, 1.0
      %v1239 = vrcp.pop %v1237
      %v1240 = vmul.f32 1.0, %v1239
      %v1241 = vrcp.pop %v1238
      %v1242 = vmul.f32 1.0, %v1241
      %v1243 = vlaneseq
      %v1244 = vshrl.u32 %v1243, 7
      %v1245 = vsub.s32 0, %v1244
      %v1246 = vrot.slane %v1240, %v1245
      %v1247 = vlaneseq
      %v1248 = vshrl.u32 %v1247, 7
      %v1249 = vsub.s32 0, %v1248
      %v1250 = vrot.slane %v1242, %v1249
      %v1253 = vcombine.low %v1246, %v1250
      %v1255 = vmul.f32 %v452, %v1253
      %1256 = vst [vmem:[%s251] sm:$0xff] %v1255
      %p1257 = scmp.lt.s32.totalorder %s17, 1
      %s1258 = scalar_select %p1257, %s17, 1
      %s1259 = smul.addr %s1258, 2
      %s1260 = smul.addr %s1259, 4
      %s1261 = scalar_lea.vmem %s6, %s1260
      // Predicated region
      $region45: #{cbam_block.1} parent=43 // pred_check
        %p1262 = pneg %p166
      $region46: #{cbam_block.1} parent=43 // pred_check_branch
        %1264 = sbr.rel (%p1262) target = $region48
      $region47: #{cbam_block.1} parent=43 // pred_region
        _
      $region48: #{cbam_block.1} parent=43 // pred_fallthru
        _
    $region44: #{cbam_block.1} parent=5 // pred_fallthru
      _
    %p1265 = scmp.le.s32.totalorder 2, %s12
    // Predicated region
    $region49: #{cbam_block.1} parent=5 // pred_check
      %p1266 = pneg %p1265
    $region50: #{cbam_block.1} parent=5 // pred_check_branch
      %1268 = sbr.rel (%p1266) target = $region52
    $region51: #{cbam_block.1} parent=5 // pred_region
      %s1269 = ssub.s32 %s12, 2
      // Predicated region
      $region53: #{cbam_block.1} parent=51 // pred_check
        %p1270 = pneg %p172
      $region54: #{cbam_block.1} parent=51 // pred_check_branch
        %1272 = sbr.rel (%p1270) target = $region56
      $region55: #{cbam_block.1} parent=51 // pred_region
        %p1273 = scmp.lt.s32.totalorder %s18, 1
        %s1274 = scalar_select %p1273, %s18, 1
        %s1275 = smul.addr %s1274, 2
        %s1276 = smul.addr %s1275, 4
        %s1277 = scalar_lea.vmem %s6, %s1276
      $region56: #{cbam_block.1} parent=51 // pred_fallthru
        _
    $region52: #{cbam_block.1} parent=5 // pred_fallthru
      _
  $region6: #{cbam_block.1} parent=0 // loop_footer
    %s16 = sadd.s32 1, %s12
  $region7: #{cbam_block.1} parent=0 // loop_footer_branch
    %11 = sbr.rel target = $region3
  $region8: #{cbam_block.1} parent=0 // loop_exit
    _

</llo_original>
